<compile_context>
chip_gen: v7x
topology: tpu7x:2x2x1
jax: 0.10.0
libtpu: 0.0.40
codegen_flags: <defaults>
</compile_context>

<pallas_src>
import functools

import jax
import jax.numpy as jnp
import numpy as np
from jax import lax
from jax.experimental import pallas as pl
from jax.experimental.pallas import tpu as pltpu


def _bottleneck_kernel(x_ref, w1_ref, b1_ref, w2_ref, b2_ref, w3_ref, b3_ref,
                       mask_ref, out_ref, slab_ref, *, shifts, compute_dtype):
    """Fused Bottleneck forward for one block of b_tile images.

    x_ref    : (Cin, L)   io dtype   input block (b_tile images concat on lanes)
    w1_ref   : (P, Cin)   compute    conv1 weight, bn1 scale folded in
    w2_ref   : (P, 9*P)   compute    conv2 weight (im2col layout), bn2 folded
    w3_ref   : (Cout, P)  compute    conv3 weight, bn3 scale folded in
    b*_ref   : (C, 1)     f32        folded BN biases
    mask_ref : (9, 1, L)  f32        destination-validity masks for 3x3 taps
    out_ref  : (Cout, L)  io dtype
    slab_ref : (9*P, L)   compute    VMEM scratch: im2col slab for conv2
    """
    L = x_ref.shape[1]
    P = w1_ref.shape[0]

    x_blk = x_ref[...]
    x_f32 = x_blk.astype(jnp.float32)            # residual kept in f32

    # ---- conv1 (1x1) + bn1 (scale folded) + relu: ONE matmul per block ----
    h1 = jnp.dot(w1_ref[...], x_blk.astype(compute_dtype),
                 preferred_element_type=jnp.float32)
    h1 = jnp.maximum(h1 + b1_ref[...], 0.0)      # (P, L) f32

    # ---- conv2 (3x3, pad=1) as im2col + ONE matmul with K = 9*P ----
    # Each tap is an XLU roll of h1 along the lane axis followed by a dense
    # full-lane store into the compute-dtype slab.  Destination-side masks
    # re-create the conv zero padding (and kill wrap-around / cross-image /
    # lane-padding pollution), so the slab needs no zero-init and every
    # store is full width.
    for k, s in enumerate(shifts):
        rows = pl.ds(k * P, P)
        if s == 0:                               # centre tap: no roll, no mask
            slab_ref[rows, :] = h1.astype(compute_dtype)
        else:
            rolled = pltpu.roll(h1, shift=(-s) % L, axis=1)
            slab_ref[rows, :] = (rolled * mask_ref[k]).astype(compute_dtype)
    h2 = jnp.dot(w2_ref[...], slab_ref[...],
                 preferred_element_type=jnp.float32)
    h2 = jnp.maximum(h2 + b2_ref[...], 0.0)      # (P, L) f32

    # ---- conv3 (1x1) + bn3 (scale folded) + residual add + relu ----
    h3 = jnp.dot(w3_ref[...], h2.astype(compute_dtype),
                 preferred_element_type=jnp.float32)
    out_ref[...] = jnp.maximum(h3 + b3_ref[...] + x_f32, 0.0).astype(out_ref.dtype)


def _conv3x3_dest_masks(H, W, HW_pad, b_tile):
    """mask[k][0, j] == 1 iff 3x3 tap k = (dh+1)*3 + (dw+1) reads an in-bounds
    source pixel for output pixel j (per image); zero over the lane-padding
    columns; tiled b_tile times along the concatenated lane axis."""
    oh = np.arange(H)[:, None]
    ow = np.arange(W)[None, :]
    masks = []
    for dh in (-1, 0, 1):
        for dw in (-1, 0, 1):
            valid = ((oh + dh >= 0) & (oh + dh < H) &
                     (ow + dw >= 0) & (ow + dw < W))
            flat = np.zeros((HW_pad,), np.float32)
            flat[:H * W] = valid.reshape(-1).astype(np.float32)
            masks.append(np.tile(flat, b_tile)[None, :])
    return jnp.asarray(np.stack(masks, axis=0))      # (9, 1, b_tile*HW_pad)


def bottleneck_pallas(x, params, *, compute_dtype=jnp.bfloat16, b_tile=1,
                      out_dtype=None, vmem_limit_bytes=32 * 1024 * 1024):
    """Bottleneck forward (stride=1, downsample=None).  x is NCHW.

    compute_dtype : dtype of the MXU operands and of the im2col slab
                    (bf16 by default); element-wise math stays f32.
    out_dtype     : HBM output dtype (defaults to x.dtype, so pass a bf16 x
                    for bf16 HBM I/O).
    """
    (w1, s1, b1, w2, s2, b2, w3, s3, b3) = params
    N, Cin, H, W = x.shape
    P = w1.shape[1]
    Cout = w3.shape[1]
    assert Cin == Cout, "stride=1 / downsample=None needs inplanes == 4*planes"
    assert N % b_tile == 0
    HW = H * W
    HW_pad = 128 * pl.cdiv(HW, 128)        # lane-pad each image to 128k lanes
    L = b_tile * HW_pad
    out_dtype = x.dtype if out_dtype is None else out_dtype

    # Fold BN scales into the conv weights on the host; only bias adds (and
    # ReLU / residual) remain in-kernel.  Weights stored transposed so every
    # conv is `W @ X` with the lane-dense spatial axis as the matmul output.
    w1t = (w1 * s1[None, :]).T.astype(compute_dtype)                      # (P, Cin)
    w2t = (w2 * s2[None, None, None, :]).reshape(9 * P, P).T.astype(compute_dtype)  # (P, 9P)
    w3t = (w3 * s3[None, :]).T.astype(compute_dtype)                      # (Cout, P)
    b1c = b1.reshape(P, 1).astype(jnp.float32)
    b2c = b2.reshape(P, 1).astype(jnp.float32)
    b3c = b3.reshape(Cout, 1).astype(jnp.float32)
    masks = _conv3x3_dest_masks(H, W, HW_pad, b_tile)                     # (9,1,L)

    # Layout plumbing: NCHW -> (Cin, N*HW_pad) so each grid step sees a
    # lane-dense (Cin, b_tile*HW_pad) block (one matmul per conv per step).
    x2 = x.reshape(N, Cin, HW)
    if HW_pad != HW:
        x2 = jnp.pad(x2, ((0, 0), (0, 0), (0, HW_pad - HW)))
    x2 = jnp.transpose(x2, (1, 0, 2)).reshape(Cin, N * HW_pad)

    shifts = tuple(dh * W + dw for dh in (-1, 0, 1) for dw in (-1, 0, 1))
    kernel = functools.partial(_bottleneck_kernel, shifts=shifts,
                               compute_dtype=compute_dtype)

    def _rep(a):                       # whole-array block, same every step
        nd = a.ndim
        return pl.BlockSpec(a.shape, lambda i, _nd=nd: (0,) * _nd)

    out = pl.pallas_call(
        kernel,
        out_shape=jax.ShapeDtypeStruct((Cout, N * HW_pad), out_dtype),
        grid_spec=pltpu.PrefetchScalarGridSpec(
            num_scalar_prefetch=0,
            grid=(N // b_tile,),
            in_specs=[
                pl.BlockSpec((Cin, L), lambda i: (0, i)),
                _rep(w1t), _rep(b1c),
                _rep(w2t), _rep(b2c),
                _rep(w3t), _rep(b3c),
                _rep(masks),
            ],
            out_specs=pl.BlockSpec((Cout, L), lambda i: (0, i)),
            scratch_shapes=[pltpu.VMEM((9 * P, L), compute_dtype)],
        ),
        compiler_params=pltpu.CompilerParams(
            dimension_semantics=("parallel",),
            vmem_limit_bytes=vmem_limit_bytes,
        ),
    )(x2, w1t, b1c, w2t, b2c, w3t, b3c, masks)

    out = out.reshape(Cout, N, HW_pad)[:, :, :HW]
    return jnp.transpose(out, (1, 0, 2)).reshape(N, Cout, H, W)


def make_bn_fold(key, c, eps=1e-5):
    k1, k2, k3, k4 = jax.random.split(key, 4)
    gamma = 1.0 + 0.1 * jax.random.normal(k1, (c,), jnp.float32)
    beta = 0.1 * jax.random.normal(k2, (c,), jnp.float32)
    mean = 0.1 * jax.random.normal(k3, (c,), jnp.float32)
    var = 1.0 + 0.1 * jax.random.uniform(k4, (c,), jnp.float32)
    scale = gamma / jnp.sqrt(var + eps)
    bias = beta - mean * scale
    return scale, bias


def reference_nchw(x_nchw, params):
    (w1, s1, b1, w2, s2, b2, w3, s3, b3) = params
    x = jnp.transpose(x_nchw, (0, 2, 3, 1))            # NHWC
    dn = ("NHWC", "HWIO", "NHWC")
    h = lax.conv_general_dilated(x, w1.reshape(1, 1, *w1.shape), (1, 1),
                                 "VALID", dimension_numbers=dn)
    h = jnp.maximum(h * s1 + b1, 0.0)
    h = lax.conv_general_dilated(h, w2, (1, 1), ((1, 1), (1, 1)),
                                 dimension_numbers=dn)
    h = jnp.maximum(h * s2 + b2, 0.0)
    h = lax.conv_general_dilated(h, w3.reshape(1, 1, *w3.shape), (1, 1),
                                 "VALID", dimension_numbers=dn)
    h = h * s3 + b3
    h = jnp.maximum(h + x, 0.0)
    return jnp.transpose(h, (0, 3, 1, 2))              # back to NCHW


if __name__ == "__main__":
    key = jax.random.PRNGKey(0)
    planes = 8
    inplanes = cout = planes * 4      # residual (no downsample) needs Cin==Cout
    N = 4

    k1, k2, k3, kb1, kb2, kb3, kx1, kx2 = jax.random.split(key, 8)
    w1 = 0.1 * jax.random.normal(k1, (inplanes, planes), jnp.float32)      # 1x1 (Cin,P)
    w2 = 0.1 * jax.random.normal(k2, (3, 3, planes, planes), jnp.float32)  # 3x3 HWIO
    w3 = 0.1 * jax.random.normal(k3, (planes, cout), jnp.float32)          # 1x1 (P,Cout)
    s1, b1 = make_bn_fold(kb1, planes)
    s2, b2 = make_bn_fold(kb2, planes)
    s3, b3 = make_bn_fold(kb3, cout)
    params = (w1, s1, b1, w2, s2, b2, w3, s3, b3)

    # Case 1: 16x16 spatial (H*W = 256, lane aligned), exact f32 matmul path.
    x = jax.random.normal(kx1, (N, inplanes, 16, 16), jnp.float32)
    ref = jax.block_until_ready(reference_nchw(x, params))
    out_f32 = jax.block_until_ready(
        bottleneck_pallas(x, params, compute_dtype=jnp.float32, b_tile=2))
    np.testing.assert_allclose(np.asarray(out_f32), np.asarray(ref),
                               rtol=5e-4, atol=5e-4)

    # Case 2: default perf config -- bf16 MXU operands, bf16 slab, bf16 HBM I/O.
    out_bf16 = jax.block_until_ready(
        bottleneck_pallas(x.astype(jnp.bfloat16), params, b_tile=2))
    np.testing.assert_allclose(np.asarray(out_bf16.astype(jnp.float32)),
                               np.asarray(ref), rtol=5e-2, atol=5e-2)

    # Case 3: 14x14 spatial (H*W = 196 -> lane-padded to 256), exact f32 path.
    x14 = jax.random.normal(kx2, (N, inplanes, 14, 14), jnp.float32)
    ref14 = jax.block_until_ready(reference_nchw(x14, params))
    out14 = jax.block_until_ready(
        bottleneck_pallas(x14, params, compute_dtype=jnp.float32, b_tile=2))
    np.testing.assert_allclose(np.asarray(out14), np.asarray(ref14),
                               rtol=5e-4, atol=5e-4)

    print("KERNEL_OK")
</pallas_src>

<mosaic_0001>
module attributes {stable_mosaic.version = 11 : i64} {
  func.func @_bottleneck_kernel(%arg0: i32, %arg1: memref<32x512xf32, #tpu.memory_space<vmem>>, %arg2: memref<8x32xf32, #tpu.memory_space<vmem>>, %arg3: memref<8x1xf32, #tpu.memory_space<vmem>>, %arg4: memref<8x72xf32, #tpu.memory_space<vmem>>, %arg5: memref<8x1xf32, #tpu.memory_space<vmem>>, %arg6: memref<32x8xf32, #tpu.memory_space<vmem>>, %arg7: memref<32x1xf32, #tpu.memory_space<vmem>>, %arg8: memref<9x1x512xf32, #tpu.memory_space<vmem>>, %arg9: memref<32x512xf32, #tpu.memory_space<vmem>>, %arg10: memref<72x512xf32, #tpu.memory_space<vmem>>) attributes {dimension_semantics = [#tpu.dimension_semantics<parallel>], iteration_bounds = array<i64: 2>, scalar_prefetch = 0 : i64, scratch_operands = 1 : i64, tpu.core_type = #tpu.core_type<tc>, window_params = [{transform_indices = @transform_0, window_bounds = array<i64: 32, 512>}, {pipeline_mode = #tpu.pipeline_mode<synchronous>, transform_indices = @transform_1, window_bounds = array<i64: 8, 32>}, {pipeline_mode = #tpu.pipeline_mode<synchronous>, transform_indices = @transform_2, window_bounds = array<i64: 8, 1>}, {pipeline_mode = #tpu.pipeline_mode<synchronous>, transform_indices = @transform_3, window_bounds = array<i64: 8, 72>}, {pipeline_mode = #tpu.pipeline_mode<synchronous>, transform_indices = @transform_4, window_bounds = array<i64: 8, 1>}, {pipeline_mode = #tpu.pipeline_mode<synchronous>, transform_indices = @transform_5, window_bounds = array<i64: 32, 8>}, {pipeline_mode = #tpu.pipeline_mode<synchronous>, transform_indices = @transform_6, window_bounds = array<i64: 32, 1>}, {pipeline_mode = #tpu.pipeline_mode<synchronous>, transform_indices = @transform_7, window_bounds = array<i64: 9, 1, 512>}, {transform_indices = @transform_8, window_bounds = array<i64: 32, 512>}]} {
    %c0 = arith.constant 0 : index
    %c0_0 = arith.constant 0 : index
    %0 = vector.load %arg1[%c0, %c0_0] : memref<32x512xf32, #tpu.memory_space<vmem>>, vector<32x512xf32>
    %c0_1 = arith.constant 0 : index
    %c0_2 = arith.constant 0 : index
    %1 = vector.load %arg2[%c0_1, %c0_2] : memref<8x32xf32, #tpu.memory_space<vmem>>, vector<8x32xf32>
    %cst = arith.constant dense<0.000000e+00> : vector<8x512xf32>
    %2 = tpu.matmul %1, %0, %cst {dimension_numbers = #tpu.dot_dimension_numbers<[1], [0], [0], [1], [0, 0, 1, 1], [], []>} : vector<8x32xf32>, vector<32x512xf32>, vector<8x512xf32> -> vector<8x512xf32>
    %c0_3 = arith.constant 0 : index
    %c0_4 = arith.constant 0 : index
    %3 = vector.load %arg3[%c0_3, %c0_4] : memref<8x1xf32, #tpu.memory_space<vmem>>, vector<8x1xf32>
    %4 = vector.broadcast %3 : vector<8x1xf32> to vector<8x512xf32>
    %5 = arith.addf %2, %4 : vector<8x512xf32>
    %cst_5 = arith.constant 0.000000e+00 : f32
    %6 = vector.broadcast %cst_5 : f32 to vector<8x512xf32>
    %7 = arith.maximumf %5, %6 : vector<8x512xf32>
    %c17_i32 = arith.constant 17 : i32
    %8 = tpu.dynamic_rotate %7 by %c17_i32 dim 1 : vector<8x512xf32>, i32 -> vector<8x512xf32>
    %c0_6 = arith.constant 0 : index
    %c0_7 = arith.constant 0 : index
    %c0_8 = arith.constant 0 : index
    %9 = vector.load %arg8[%c0_6, %c0_7, %c0_8] : memref<9x1x512xf32, #tpu.memory_space<vmem>>, vector<1x1x512xf32>
    %10 = vector.shape_cast %9 : vector<1x1x512xf32> to vector<1x512xf32>
    %11 = vector.broadcast %10 : vector<1x512xf32> to vector<8x512xf32>
    %12 = arith.mulf %8, %11 : vector<8x512xf32>
    %c0_9 = arith.constant 0 : index
    %c0_10 = arith.constant 0 : index
    %13 = vector.load %arg10[%c0_9, %c0_10] : memref<72x512xf32, #tpu.memory_space<vmem>>, vector<8x512xf32>
    tpu.vector_store %arg10[%c0_9, %c0_10], %12 {strides = array<i32>} : memref<72x512xf32, #tpu.memory_space<vmem>>, vector<8x512xf32>,
    %c16_i32 = arith.constant 16 : i32
    %14 = tpu.dynamic_rotate %7 by %c16_i32 dim 1 : vector<8x512xf32>, i32 -> vector<8x512xf32>
    %c1 = arith.constant 1 : index
    %c0_11 = arith.constant 0 : index
    %c0_12 = arith.constant 0 : index
    %15 = vector.load %arg8[%c1, %c0_11, %c0_12] : memref<9x1x512xf32, #tpu.memory_space<vmem>>, vector<1x1x512xf32>
    %16 = vector.shape_cast %15 : vector<1x1x512xf32> to vector<1x512xf32>
    %17 = vector.broadcast %16 : vector<1x512xf32> to vector<8x512xf32>
    %18 = arith.mulf %14, %17 : vector<8x512xf32>
    %c8 = arith.constant 8 : index
    %c0_13 = arith.constant 0 : index
    %19 = vector.load %arg10[%c8, %c0_13] : memref<72x512xf32, #tpu.memory_space<vmem>>, vector<8x512xf32>
    tpu.vector_store %arg10[%c8, %c0_13], %18 {strides = array<i32>} : memref<72x512xf32, #tpu.memory_space<vmem>>, vector<8x512xf32>,
    %c15_i32 = arith.constant 15 : i32
    %20 = tpu.dynamic_rotate %7 by %c15_i32 dim 1 : vector<8x512xf32>, i32 -> vector<8x512xf32>
    %c2 = arith.constant 2 : index
    %c0_14 = arith.constant 0 : index
    %c0_15 = arith.constant 0 : index
    %21 = vector.load %arg8[%c2, %c0_14, %c0_15] : memref<9x1x512xf32, #tpu.memory_space<vmem>>, vector<1x1x512xf32>
    %22 = vector.shape_cast %21 : vector<1x1x512xf32> to vector<1x512xf32>
    %23 = vector.broadcast %22 : vector<1x512xf32> to vector<8x512xf32>
    %24 = arith.mulf %20, %23 : vector<8x512xf32>
    %c16 = arith.constant 16 : index
    %c0_16 = arith.constant 0 : index
    %25 = vector.load %arg10[%c16, %c0_16] : memref<72x512xf32, #tpu.memory_space<vmem>>, vector<8x512xf32>
    tpu.vector_store %arg10[%c16, %c0_16], %24 {strides = array<i32>} : memref<72x512xf32, #tpu.memory_space<vmem>>, vector<8x512xf32>,
    %c1_i32 = arith.constant 1 : i32
    %26 = tpu.dynamic_rotate %7 by %c1_i32 dim 1 : vector<8x512xf32>, i32 -> vector<8x512xf32>
    %c3 = arith.constant 3 : index
    %c0_17 = arith.constant 0 : index
    %c0_18 = arith.constant 0 : index
    %27 = vector.load %arg8[%c3, %c0_17, %c0_18] : memref<9x1x512xf32, #tpu.memory_space<vmem>>, vector<1x1x512xf32>
    %28 = vector.shape_cast %27 : vector<1x1x512xf32> to vector<1x512xf32>
    %29 = vector.broadcast %28 : vector<1x512xf32> to vector<8x512xf32>
    %30 = arith.mulf %26, %29 : vector<8x512xf32>
    %c24 = arith.constant 24 : index
    %c0_19 = arith.constant 0 : index
    %31 = vector.load %arg10[%c24, %c0_19] : memref<72x512xf32, #tpu.memory_space<vmem>>, vector<8x512xf32>
    tpu.vector_store %arg10[%c24, %c0_19], %30 {strides = array<i32>} : memref<72x512xf32, #tpu.memory_space<vmem>>, vector<8x512xf32>,
    %c32 = arith.constant 32 : index
    %c0_20 = arith.constant 0 : index
    %32 = vector.load %arg10[%c32, %c0_20] : memref<72x512xf32, #tpu.memory_space<vmem>>, vector<8x512xf32>
    tpu.vector_store %arg10[%c32, %c0_20], %7 {strides = array<i32>} : memref<72x512xf32, #tpu.memory_space<vmem>>, vector<8x512xf32>,
    %c511_i32 = arith.constant 511 : i32
    %33 = tpu.dynamic_rotate %7 by %c511_i32 dim 1 : vector<8x512xf32>, i32 -> vector<8x512xf32>
    %c5 = arith.constant 5 : index
    %c0_21 = arith.constant 0 : index
    %c0_22 = arith.constant 0 : index
    %34 = vector.load %arg8[%c5, %c0_21, %c0_22] : memref<9x1x512xf32, #tpu.memory_space<vmem>>, vector<1x1x512xf32>
    %35 = vector.shape_cast %34 : vector<1x1x512xf32> to vector<1x512xf32>
    %36 = vector.broadcast %35 : vector<1x512xf32> to vector<8x512xf32>
    %37 = arith.mulf %33, %36 : vector<8x512xf32>
    %c40 = arith.constant 40 : index
    %c0_23 = arith.constant 0 : index
    %38 = vector.load %arg10[%c40, %c0_23] : memref<72x512xf32, #tpu.memory_space<vmem>>, vector<8x512xf32>
    tpu.vector_store %arg10[%c40, %c0_23], %37 {strides = array<i32>} : memref<72x512xf32, #tpu.memory_space<vmem>>, vector<8x512xf32>,
    %c497_i32 = arith.constant 497 : i32
    %39 = tpu.dynamic_rotate %7 by %c497_i32 dim 1 : vector<8x512xf32>, i32 -> vector<8x512xf32>
    %c6 = arith.constant 6 : index
    %c0_24 = arith.constant 0 : index
    %c0_25 = arith.constant 0 : index
    %40 = vector.load %arg8[%c6, %c0_24, %c0_25] : memref<9x1x512xf32, #tpu.memory_space<vmem>>, vector<1x1x512xf32>
    %41 = vector.shape_cast %40 : vector<1x1x512xf32> to vector<1x512xf32>
    %42 = vector.broadcast %41 : vector<1x512xf32> to vector<8x512xf32>
    %43 = arith.mulf %39, %42 : vector<8x512xf32>
    %c48 = arith.constant 48 : index
    %c0_26 = arith.constant 0 : index
    %44 = vector.load %arg10[%c48, %c0_26] : memref<72x512xf32, #tpu.memory_space<vmem>>, vector<8x512xf32>
    tpu.vector_store %arg10[%c48, %c0_26], %43 {strides = array<i32>} : memref<72x512xf32, #tpu.memory_space<vmem>>, vector<8x512xf32>,
    %c496_i32 = arith.constant 496 : i32
    %45 = tpu.dynamic_rotate %7 by %c496_i32 dim 1 : vector<8x512xf32>, i32 -> vector<8x512xf32>
    %c7 = arith.constant 7 : index
    %c0_27 = arith.constant 0 : index
    %c0_28 = arith.constant 0 : index
    %46 = vector.load %arg8[%c7, %c0_27, %c0_28] : memref<9x1x512xf32, #tpu.memory_space<vmem>>, vector<1x1x512xf32>
    %47 = vector.shape_cast %46 : vector<1x1x512xf32> to vector<1x512xf32>
    %48 = vector.broadcast %47 : vector<1x512xf32> to vector<8x512xf32>
    %49 = arith.mulf %45, %48 : vector<8x512xf32>
    %c56 = arith.constant 56 : index
    %c0_29 = arith.constant 0 : index
    %50 = vector.load %arg10[%c56, %c0_29] : memref<72x512xf32, #tpu.memory_space<vmem>>, vector<8x512xf32>
    tpu.vector_store %arg10[%c56, %c0_29], %49 {strides = array<i32>} : memref<72x512xf32, #tpu.memory_space<vmem>>, vector<8x512xf32>,
    %c495_i32 = arith.constant 495 : i32
    %51 = tpu.dynamic_rotate %7 by %c495_i32 dim 1 : vector<8x512xf32>, i32 -> vector<8x512xf32>
    %c8_30 = arith.constant 8 : index
    %c0_31 = arith.constant 0 : index
    %c0_32 = arith.constant 0 : index
    %52 = vector.load %arg8[%c8_30, %c0_31, %c0_32] : memref<9x1x512xf32, #tpu.memory_space<vmem>>, vector<1x1x512xf32>
    %53 = vector.shape_cast %52 : vector<1x1x512xf32> to vector<1x512xf32>
    %54 = vector.broadcast %53 : vector<1x512xf32> to vector<8x512xf32>
    %55 = arith.mulf %51, %54 : vector<8x512xf32>
    %c64 = arith.constant 64 : index
    %c0_33 = arith.constant 0 : index
    %56 = vector.load %arg10[%c64, %c0_33] : memref<72x512xf32, #tpu.memory_space<vmem>>, vector<8x512xf32>
    tpu.vector_store %arg10[%c64, %c0_33], %55 {strides = array<i32>} : memref<72x512xf32, #tpu.memory_space<vmem>>, vector<8x512xf32>,
    %c0_34 = arith.constant 0 : index
    %c0_35 = arith.constant 0 : index
    %57 = vector.load %arg4[%c0_34, %c0_35] : memref<8x72xf32, #tpu.memory_space<vmem>>, vector<8x72xf32>
    %c0_36 = arith.constant 0 : index
    %c0_37 = arith.constant 0 : index
    %58 = vector.load %arg10[%c0_36, %c0_37] : memref<72x512xf32, #tpu.memory_space<vmem>>, vector<72x512xf32>
    %cst_38 = arith.constant dense<0.000000e+00> : vector<8x512xf32>
    %59 = tpu.matmul %57, %58, %cst_38 {dimension_numbers = #tpu.dot_dimension_numbers<[1], [0], [0], [1], [0, 0, 1, 1], [], []>} : vector<8x72xf32>, vector<72x512xf32>, vector<8x512xf32> -> vector<8x512xf32>
    %c0_39 = arith.constant 0 : index
    %c0_40 = arith.constant 0 : index
    %60 = vector.load %arg5[%c0_39, %c0_40] : memref<8x1xf32, #tpu.memory_space<vmem>>, vector<8x1xf32>
    %61 = vector.broadcast %60 : vector<8x1xf32> to vector<8x512xf32>
    %62 = arith.addf %59, %61 : vector<8x512xf32>
    %cst_41 = arith.constant 0.000000e+00 : f32
    %63 = vector.broadcast %cst_41 : f32 to vector<8x512xf32>
    %64 = arith.maximumf %62, %63 : vector<8x512xf32>
    %c0_42 = arith.constant 0 : index
    %c0_43 = arith.constant 0 : index
    %65 = vector.load %arg6[%c0_42, %c0_43] : memref<32x8xf32, #tpu.memory_space<vmem>>, vector<32x8xf32>
    %cst_44 = arith.constant dense<0.000000e+00> : vector<32x512xf32>
    %66 = tpu.matmul %65, %64, %cst_44 {dimension_numbers = #tpu.dot_dimension_numbers<[1], [0], [0], [1], [0, 0, 1, 1], [], []>} : vector<32x8xf32>, vector<8x512xf32>, vector<32x512xf32> -> vector<32x512xf32>
    %c0_45 = arith.constant 0 : index
    %c0_46 = arith.constant 0 : index
    %67 = vector.load %arg7[%c0_45, %c0_46] : memref<32x1xf32, #tpu.memory_space<vmem>>, vector<32x1xf32>
    %68 = vector.broadcast %67 : vector<32x1xf32> to vector<32x512xf32>
    %69 = arith.addf %66, %68 : vector<32x512xf32>
    %70 = arith.addf %69, %0 : vector<32x512xf32>
    %cst_47 = arith.constant 0.000000e+00 : f32
    %71 = vector.broadcast %cst_47 : f32 to vector<32x512xf32>
    %72 = arith.maximumf %70, %71 : vector<32x512xf32>
    %c0_48 = arith.constant 0 : index
    %c0_49 = arith.constant 0 : index
    %73 = vector.load %arg9[%c0_48, %c0_49] : memref<32x512xf32, #tpu.memory_space<vmem>>, vector<32x512xf32>
    tpu.vector_store %arg9[%c0_48, %c0_49], %72 {strides = array<i32>} : memref<32x512xf32, #tpu.memory_space<vmem>>, vector<32x512xf32>,
    return
  }
  func.func @transform_0(%arg0: i32) -> (i32, i32) {
    %c0_i32 = arith.constant 0 : i32
    %c0_i32_0 = arith.constant 0 : i32
    return %c0_i32, %arg0 : i32, i32
  }
  func.func @transform_1(%arg0: i32) -> (i32, i32) {
    %c0_i32 = arith.constant 0 : i32
    %c0_i32_0 = arith.constant 0 : i32
    %c0_i32_1 = arith.constant 0 : i32
    return %c0_i32, %c0_i32_0 : i32, i32
  }
  func.func @transform_2(%arg0: i32) -> (i32, i32) {
    %c0_i32 = arith.constant 0 : i32
    %c0_i32_0 = arith.constant 0 : i32
    %c0_i32_1 = arith.constant 0 : i32
    return %c0_i32, %c0_i32_0 : i32, i32
  }
  func.func @transform_3(%arg0: i32) -> (i32, i32) {
    %c0_i32 = arith.constant 0 : i32
    %c0_i32_0 = arith.constant 0 : i32
    %c0_i32_1 = arith.constant 0 : i32
    return %c0_i32, %c0_i32_0 : i32, i32
  }
  func.func @transform_4(%arg0: i32) -> (i32, i32) {
    %c0_i32 = arith.constant 0 : i32
    %c0_i32_0 = arith.constant 0 : i32
    %c0_i32_1 = arith.constant 0 : i32
    return %c0_i32, %c0_i32_0 : i32, i32
  }
  func.func @transform_5(%arg0: i32) -> (i32, i32) {
    %c0_i32 = arith.constant 0 : i32
    %c0_i32_0 = arith.constant 0 : i32
    %c0_i32_1 = arith.constant 0 : i32
    return %c0_i32, %c0_i32_0 : i32, i32
  }
  func.func @transform_6(%arg0: i32) -> (i32, i32) {
    %c0_i32 = arith.constant 0 : i32
    %c0_i32_0 = arith.constant 0 : i32
    %c0_i32_1 = arith.constant 0 : i32
    return %c0_i32, %c0_i32_0 : i32, i32
  }
  func.func @transform_7(%arg0: i32) -> (i32, i32, i32) {
    %c0_i32 = arith.constant 0 : i32
    %c0_i32_0 = arith.constant 0 : i32
    %c0_i32_1 = arith.constant 0 : i32
    %c0_i32_2 = arith.constant 0 : i32
    return %c0_i32, %c0_i32_0, %c0_i32_1 : i32, i32, i32
  }
  func.func @transform_8(%arg0: i32) -> (i32, i32) {
    %c0_i32 = arith.constant 0 : i32
    %c0_i32_0 = arith.constant 0 : i32
    return %c0_i32, %arg0 : i32, i32
  }
}

</mosaic_0001>

<llo_original>
// kernel: tpu_custom_call.1
$region0: #{tpu_custom_call.1}
  #allocation0 [shape = 'u32[]', space=smem, size = 0x4, offset = 0x4, fixed_abs, tag = 'smem constant byte address 0x4 - core index']
  #allocation1 [shape = 'u32[144,128]{1,0:T(1,128)}', space=vmem, size = 0x12000, scoped, tag = 'internal scratch']
  #allocation2 [shape = 'f32[72,512]{1,0:T(8,128)}', space=vmem, size = 0x24000, scoped, tag = 'scratch operand']
  %s0 = inlined_call_operand.hbm [shape: f32[32,1024], index: 0, kind: input, shape index: {}]
  %s1 = inlined_call_operand.vmem [shape: f32[8,32], index: 1, kind: input, shape index: {}]
  %s2 = inlined_call_operand.vmem [shape: f32[8,1], index: 2, kind: input, shape index: {}]
  %s3 = inlined_call_operand.vmem [shape: f32[8,72], index: 3, kind: input, shape index: {}]
  %s4 = inlined_call_operand.vmem [shape: f32[8,1], index: 4, kind: input, shape index: {}]
  %s5 = inlined_call_operand.vmem [shape: f32[32,8], index: 5, kind: input, shape index: {}]
  %s6 = inlined_call_operand.vmem [shape: f32[32,1], index: 6, kind: input, shape index: {}]
  %s7 = inlined_call_operand.vmem [shape: f32[9,1,512], index: 7, kind: input, shape index: {}]
  %s8 = inlined_call_operand.hbm [shape: f32[32,1024], index: 8, kind: output, shape index: {}]
  %s9 = sld [smem:[#allocation0]]
  $region69: #{tpu_custom_call.1} parent=0
    _
  %s11 = ssub.s32 1, %s9
  %s12 = scalar_select 0, %s11, %s9
  $region1: #{tpu_custom_call.1} parent=0
    #allocation3 [shape = 'u8[131072]{0}', space=vmem, size = 0x20000, scoped, tag = 'input window, operand 0']
    #allocation4 [shape = 's32[2]{0}', space=sflag, size = 0x8, scoped, tag = 'scoped memory for tpu_custom_call.1']
    #allocation5 [shape = 's32[2]{0}', space=sflag, size = 0x8, scoped, tag = 'scoped memory for tpu_custom_call.1']
    #allocation6 [shape = 'u8[131072]{0}', space=vmem, size = 0x20000, scoped, tag = 'output window, operand 0']
    %13 = vsyncpa [#allocation4], 0
    %s14 = scalar_lea.sflag [#allocation4], 1
    %15 = vsyncpa %s14, 0
    %16 = vsyncpa [#allocation5], 0
    %s17 = scalar_lea.sflag [#allocation5], 1
    %18 = vsyncpa %s17, 0
    loop: start=0, step=1, limit=4
    $region2: #{tpu_custom_call.1} parent=1 // loop_pre_header
      _
    $region3: #{tpu_custom_call.1} parent=1 // loop_header
      %s20 = sphi 0, %s24
      %p21 = scmp.ge.s32.totalorder %s20, 4
      %s30 = sphi 0, %s32
      %s33 = sphi 0, %s30
      %s34 = sphi 0, %s33
      %s50 = sphi 0, %s34
      %s54 = sphi 0, %s54
      %s56 = sphi 0, %s54
      %s57 = sphi 0, %s56
      %s71 = sphi 0, %s57
      %s75 = sphi 0, %s75
      %s77 = sphi 0, %s75
      %s78 = sphi 0, %s77
      %s92 = sphi 0, %s78
      %s96 = sphi 0, %s96
      %s98 = sphi 0, %s96
      %s99 = sphi 0, %s98
      %s113 = sphi 0, %s99
      %s117 = sphi 0, %s117
      %s119 = sphi 0, %s117
      %s120 = sphi 0, %s119
      %s134 = sphi 0, %s120
      %s138 = sphi 0, %s138
      %s140 = sphi 0, %s138
      %s141 = sphi 0, %s140
      %s155 = sphi 0, %s141
      %s159 = sphi 0, %s159
      %s161 = sphi 0, %s159
      %s162 = sphi 0, %s161
      %s176 = sphi 0, %s162
      %s180 = sphi 0, %s180
      %s182 = sphi 0, %s180
      %s183 = sphi 0, %s182
      %s197 = sphi 0, %s183
      %s203 = sphi 0, %s205
      %s206 = sphi 0, %s203
      %s207 = sphi 0, %s206
      %s223 = sphi 0, %s207
    $region4: #{tpu_custom_call.1} parent=1 // loop_header_branch
      %23 = sbr.rel (%p21) target = $region8
    $region5: #{tpu_custom_call.1} parent=1 // loop_body
      %s25 = ssub.s32 %s20, 1
      %s26 = ssub.s32 %s20, 2
      %s27 = sadd.s32 %s20, 1
      %s28 = ssub.s32 %s20, %s27
      %p29 = scmp.eq.s32.totalorder %s28, 0
      %s31 = sadd.s32 %s30, 1
      %s32 = scalar_select %p29, %s30, %s31
      %p35 = pneg %p29
      %p36 = scmp.eq.s32.totalorder %s20, 1
      %p37 = por %p35, %p36
      %p38 = scmp.ne.s32.totalorder %s30, %s33
      %p39 = scmp.eq.s32.totalorder %s20, 0
      %p40 = por %p38, %p39
      %p41 = scmp.ne.s32.totalorder %s30, %s33
      %p42 = scmp.eq.s32.totalorder %s25, 1
      %p43 = por %p41, %p42
      %p44 = scmp.ne.s32.totalorder %s33, %s34
      %p45 = scmp.eq.s32.totalorder %s25, 0
      %p46 = por %p44, %p45
      %p47 = scmp.ne.s32.totalorder %s33, %s34
      %p48 = scmp.eq.s32.totalorder %s26, 1
      %p49 = por %p47, %p48
      %p51 = scmp.ne.s32.totalorder %s34, %s50
      %p52 = scmp.eq.s32.totalorder %s26, 0
      %p53 = por %p51, %p52
      %s55 = sadd.s32 %s54, 1
      %p58 = scmp.eq.s32.totalorder %s20, 1
      %p59 = scmp.ne.s32.totalorder %s54, %s56
      %p60 = scmp.eq.s32.totalorder %s20, 0
      %p61 = por %p59, %p60
      %p62 = scmp.ne.s32.totalorder %s54, %s56
      %p63 = scmp.eq.s32.totalorder %s25, 1
      %p64 = por %p62, %p63
      %p65 = scmp.ne.s32.totalorder %s56, %s57
      %p66 = scmp.eq.s32.totalorder %s25, 0
      %p67 = por %p65, %p66
      %p68 = scmp.ne.s32.totalorder %s56, %s57
      %p69 = scmp.eq.s32.totalorder %s26, 1
      %p70 = por %p68, %p69
      %p72 = scmp.ne.s32.totalorder %s57, %s71
      %p73 = scmp.eq.s32.totalorder %s26, 0
      %p74 = por %p72, %p73
      %s76 = sadd.s32 %s75, 1
      %p79 = scmp.eq.s32.totalorder %s20, 1
      %p80 = scmp.ne.s32.totalorder %s75, %s77
      %p81 = scmp.eq.s32.totalorder %s20, 0
      %p82 = por %p80, %p81
      %p83 = scmp.ne.s32.totalorder %s75, %s77
      %p84 = scmp.eq.s32.totalorder %s25, 1
      %p85 = por %p83, %p84
      %p86 = scmp.ne.s32.totalorder %s77, %s78
      %p87 = scmp.eq.s32.totalorder %s25, 0
      %p88 = por %p86, %p87
      %p89 = scmp.ne.s32.totalorder %s77, %s78
      %p90 = scmp.eq.s32.totalorder %s26, 1
      %p91 = por %p89, %p90
      %p93 = scmp.ne.s32.totalorder %s78, %s92
      %p94 = scmp.eq.s32.totalorder %s26, 0
      %p95 = por %p93, %p94
      %s97 = sadd.s32 %s96, 1
      %p100 = scmp.eq.s32.totalorder %s20, 1
      %p101 = scmp.ne.s32.totalorder %s96, %s98
      %p102 = scmp.eq.s32.totalorder %s20, 0
      %p103 = por %p101, %p102
      %p104 = scmp.ne.s32.totalorder %s96, %s98
      %p105 = scmp.eq.s32.totalorder %s25, 1
      %p106 = por %p104, %p105
      %p107 = scmp.ne.s32.totalorder %s98, %s99
      %p108 = scmp.eq.s32.totalorder %s25, 0
      %p109 = por %p107, %p108
      %p110 = scmp.ne.s32.totalorder %s98, %s99
      %p111 = scmp.eq.s32.totalorder %s26, 1
      %p112 = por %p110, %p111
      %p114 = scmp.ne.s32.totalorder %s99, %s113
      %p115 = scmp.eq.s32.totalorder %s26, 0
      %p116 = por %p114, %p115
      %s118 = sadd.s32 %s117, 1
      %p121 = scmp.eq.s32.totalorder %s20, 1
      %p122 = scmp.ne.s32.totalorder %s117, %s119
      %p123 = scmp.eq.s32.totalorder %s20, 0
      %p124 = por %p122, %p123
      %p125 = scmp.ne.s32.totalorder %s117, %s119
      %p126 = scmp.eq.s32.totalorder %s25, 1
      %p127 = por %p125, %p126
      %p128 = scmp.ne.s32.totalorder %s119, %s120
      %p129 = scmp.eq.s32.totalorder %s25, 0
      %p130 = por %p128, %p129
      %p131 = scmp.ne.s32.totalorder %s119, %s120
      %p132 = scmp.eq.s32.totalorder %s26, 1
      %p133 = por %p131, %p132
      %p135 = scmp.ne.s32.totalorder %s120, %s134
      %p136 = scmp.eq.s32.totalorder %s26, 0
      %p137 = por %p135, %p136
      %s139 = sadd.s32 %s138, 1
      %p142 = scmp.eq.s32.totalorder %s20, 1
      %p143 = scmp.ne.s32.totalorder %s138, %s140
      %p144 = scmp.eq.s32.totalorder %s20, 0
      %p145 = por %p143, %p144
      %p146 = scmp.ne.s32.totalorder %s138, %s140
      %p147 = scmp.eq.s32.totalorder %s25, 1
      %p148 = por %p146, %p147
      %p149 = scmp.ne.s32.totalorder %s140, %s141
      %p150 = scmp.eq.s32.totalorder %s25, 0
      %p151 = por %p149, %p150
      %p152 = scmp.ne.s32.totalorder %s140, %s141
      %p153 = scmp.eq.s32.totalorder %s26, 1
      %p154 = por %p152, %p153
      %p156 = scmp.ne.s32.totalorder %s141, %s155
      %p157 = scmp.eq.s32.totalorder %s26, 0
      %p158 = por %p156, %p157
      %s160 = sadd.s32 %s159, 1
      %p163 = scmp.eq.s32.totalorder %s20, 1
      %p164 = scmp.ne.s32.totalorder %s159, %s161
      %p165 = scmp.eq.s32.totalorder %s20, 0
      %p166 = por %p164, %p165
      %p167 = scmp.ne.s32.totalorder %s159, %s161
      %p168 = scmp.eq.s32.totalorder %s25, 1
      %p169 = por %p167, %p168
      %p170 = scmp.ne.s32.totalorder %s161, %s162
      %p171 = scmp.eq.s32.totalorder %s25, 0
      %p172 = por %p170, %p171
      %p173 = scmp.ne.s32.totalorder %s161, %s162
      %p174 = scmp.eq.s32.totalorder %s26, 1
      %p175 = por %p173, %p174
      %p177 = scmp.ne.s32.totalorder %s162, %s176
      %p178 = scmp.eq.s32.totalorder %s26, 0
      %p179 = por %p177, %p178
      %s181 = sadd.s32 %s180, 1
      %p184 = scmp.eq.s32.totalorder %s20, 1
      %p185 = scmp.ne.s32.totalorder %s180, %s182
      %p186 = scmp.eq.s32.totalorder %s20, 0
      %p187 = por %p185, %p186
      %p188 = scmp.ne.s32.totalorder %s180, %s182
      %p189 = scmp.eq.s32.totalorder %s25, 1
      %p190 = por %p188, %p189
      %p191 = scmp.ne.s32.totalorder %s182, %s183
      %p192 = scmp.eq.s32.totalorder %s25, 0
      %p193 = por %p191, %p192
      %p194 = scmp.ne.s32.totalorder %s182, %s183
      %p195 = scmp.eq.s32.totalorder %s26, 1
      %p196 = por %p194, %p195
      %p198 = scmp.ne.s32.totalorder %s183, %s197
      %p199 = scmp.eq.s32.totalorder %s26, 0
      %p200 = por %p198, %p199
      %s201 = ssub.s32 %s20, %s27
      %p202 = scmp.eq.s32.totalorder %s201, 0
      %s204 = sadd.s32 %s203, 1
      %s205 = scalar_select %p202, %s203, %s204
      %p208 = pneg %p202
      %p209 = scmp.eq.s32.totalorder %s20, 1
      %p210 = por %p208, %p209
      %p211 = scmp.ne.s32.totalorder %s203, %s206
      %p212 = scmp.eq.s32.totalorder %s20, 0
      %p213 = por %p211, %p212
      %p214 = scmp.ne.s32.totalorder %s203, %s206
      %p215 = scmp.eq.s32.totalorder %s25, 1
      %p216 = por %p214, %p215
      %p217 = scmp.ne.s32.totalorder %s206, %s207
      %p218 = scmp.eq.s32.totalorder %s25, 0
      %p219 = por %p217, %p218
      %p220 = scmp.ne.s32.totalorder %s206, %s207
      %p221 = scmp.eq.s32.totalorder %s26, 1
      %p222 = por %p220, %p221
      %p224 = scmp.ne.s32.totalorder %s207, %s223
      %p225 = scmp.eq.s32.totalorder %s26, 0
      %p226 = por %p224, %p225
      %p227 = scmp.le.s32.totalorder 1, %s20
      %p228 = scmp.lt.s32.totalorder %s20, 3
      %p229 = pnand %p227, %p228
      %p230 = pneg %p229
      // Predicated region
      $region9: #{tpu_custom_call.1} parent=5 // pred_check
        _
      $region10: #{tpu_custom_call.1} parent=5 // pred_check_branch
        %232 = sbr.rel (%p229) target = $region12
      $region11: #{tpu_custom_call.1} parent=5 // pred_region
        %s233 = ssub.s32 %s20, 1
        // Predicated region
        $region13: #{tpu_custom_call.1} parent=11 // pred_check
          %p234 = pneg %p67
        $region14: #{tpu_custom_call.1} parent=11 // pred_check_branch
          %236 = sbr.rel (%p234) target = $region16
        $region15: #{tpu_custom_call.1} parent=11 // pred_region
          _
        $region16: #{tpu_custom_call.1} parent=11 // pred_fallthru
          _
        // Predicated region
        $region17: #{tpu_custom_call.1} parent=11 // pred_check
          %p237 = pneg %p88
        $region18: #{tpu_custom_call.1} parent=11 // pred_check_branch
          %239 = sbr.rel (%p237) target = $region20
        $region19: #{tpu_custom_call.1} parent=11 // pred_region
          _
        $region20: #{tpu_custom_call.1} parent=11 // pred_fallthru
          _
        // Predicated region
        $region21: #{tpu_custom_call.1} parent=11 // pred_check
          %p240 = pneg %p109
        $region22: #{tpu_custom_call.1} parent=11 // pred_check_branch
          %242 = sbr.rel (%p240) target = $region24
        $region23: #{tpu_custom_call.1} parent=11 // pred_region
          _
        $region24: #{tpu_custom_call.1} parent=11 // pred_fallthru
          _
        // Predicated region
        $region25: #{tpu_custom_call.1} parent=11 // pred_check
          %p243 = pneg %p130
        $region26: #{tpu_custom_call.1} parent=11 // pred_check_branch
          %245 = sbr.rel (%p243) target = $region28
        $region27: #{tpu_custom_call.1} parent=11 // pred_region
          _
        $region28: #{tpu_custom_call.1} parent=11 // pred_fallthru
          _
        // Predicated region
        $region29: #{tpu_custom_call.1} parent=11 // pred_check
          %p246 = pneg %p151
        $region30: #{tpu_custom_call.1} parent=11 // pred_check_branch
          %248 = sbr.rel (%p246) target = $region32
        $region31: #{tpu_custom_call.1} parent=11 // pred_region
          _
        $region32: #{tpu_custom_call.1} parent=11 // pred_fallthru
          _
        // Predicated region
        $region33: #{tpu_custom_call.1} parent=11 // pred_check
          %p249 = pneg %p172
        $region34: #{tpu_custom_call.1} parent=11 // pred_check_branch
          %251 = sbr.rel (%p249) target = $region36
        $region35: #{tpu_custom_call.1} parent=11 // pred_region
          _
        $region36: #{tpu_custom_call.1} parent=11 // pred_fallthru
          _
        // Predicated region
        $region37: #{tpu_custom_call.1} parent=11 // pred_check
          %p252 = pneg %p193
        $region38: #{tpu_custom_call.1} parent=11 // pred_check_branch
          %254 = sbr.rel (%p252) target = $region40
        $region39: #{tpu_custom_call.1} parent=11 // pred_region
          _
        $region40: #{tpu_custom_call.1} parent=11 // pred_fallthru
          _
      $region12: #{tpu_custom_call.1} parent=5 // pred_fallthru
        _
      %p255 = scmp.lt.s32.totalorder %s20, 2
      // Predicated region
      $region41: #{tpu_custom_call.1} parent=5 // pred_check
        %p256 = pneg %p255
      $region42: #{tpu_custom_call.1} parent=5 // pred_check_branch
        %258 = sbr.rel (%p256) target = $region44
      $region43: #{tpu_custom_call.1} parent=5 // pred_region
        // Predicated region
        $region45: #{tpu_custom_call.1} parent=43 // pred_check
          %p259 = pneg %p40
        $region46: #{tpu_custom_call.1} parent=43 // pred_check_branch
          %261 = sbr.rel (%p259) target = $region48
        $region47: #{tpu_custom_call.1} parent=43 // pred_region
          %s262 = sand.u32 %s30, 1
          %s263 = scalar_lea.sflag [#allocation4], %s262
          %s264 = sand.u32 %s30, 1
          %s265 = smul.addr %s264, 128
          %s266 = scalar_lea.vmem [#allocation3], %s265
          %s267 = smul.u32 4, %s20
          %s269 = ssub.s32 2048, 2048
          %270 = vsyncadd %s263, %s269
          %s271 = smul.addr %s267, 128
          %s272 = scalar_lea.hbm %s0, %s271
          %s273 = sshll.u32 %s266, 4
          %s274 = int_to_ptr.vmem [resolvable:$true] %s273
          %279 = dma.hbm_to_vmem [thread:$0]  %s272, 2048, %s274, %s263, 1024, 512, 32
        $region48: #{tpu_custom_call.1} parent=43 // pred_fallthru
          _
      $region44: #{tpu_custom_call.1} parent=5 // pred_fallthru
        _
      %p280 = scmp.le.s32.totalorder 1, %s20
      %p281 = scmp.lt.s32.totalorder %s20, 3
      %p282 = pnand %p280, %p281
      %p283 = pneg %p282
      // Predicated region
      $region49: #{tpu_custom_call.1} parent=5 // pred_check
        _
      $region50: #{tpu_custom_call.1} parent=5 // pred_check_branch
        %285 = sbr.rel (%p282) target = $region52
      $region51: #{tpu_custom_call.1} parent=5 // pred_region
        %s286 = ssub.s32 %s20, 1
        %s287 = sand.u32 %s33, 1
        %s288 = scalar_lea.sflag [#allocation4], %s287
        %s289 = sand.u32 %s33, 1
        %s290 = smul.addr %s289, 128
        %s291 = scalar_lea.vmem [#allocation3], %s290
        // Predicated region
        $region53: #{tpu_custom_call.1} parent=51 // pred_check
          %p292 = pneg %p46
        $region54: #{tpu_custom_call.1} parent=51 // pred_check_branch
          %294 = sbr.rel (%p292) target = $region56
        $region55: #{tpu_custom_call.1} parent=51 // pred_region
          %295 = dma.done %s288, 2048
        $region56: #{tpu_custom_call.1} parent=51 // pred_fallthru
          _
        %s296 = sand.u32 %s33, 1
        %s297 = scalar_lea.sflag [#allocation4], %s296
        %s298 = sand.u32 %s33, 1
        %s299 = smul.addr %s298, 128
        %s300 = scalar_lea.vmem [#allocation3], %s299
        %p301 = pneg %p46
        %p302 = pneg %p43
        %p303 = pneg %p67
        %p304 = pneg %p64
        %p305 = pneg %p88
        %p306 = pneg %p85
        %p307 = pneg %p109
        %p308 = pneg %p106
        %p309 = pneg %p130
        %p310 = pneg %p127
        %p311 = pneg %p151
        %p312 = pneg %p148
        %p313 = pneg %p172
        %p314 = pneg %p169
        %p315 = pneg %p193
        %p316 = pneg %p190
        %p317 = pneg %p219
        %p318 = pneg %p216
        %s319 = sand.u32 %s206, 1
        %s320 = scalar_lea.sflag [#allocation5], %s319
        %s321 = sand.u32 %s206, 1
        %s322 = smul.addr %s321, 128
        %s323 = scalar_lea.vmem [#allocation6], %s322
        %s324 = smul.u32 4, %s25
        %s325 = smul.u32 4, %s25
        %v326 = vld [vmem:[%s291] sm:$0xff]
        %v327 = vld [vmem:[%s291 + $0x8] sm:$0xff]
        %v328 = vld [vmem:[%s291 + $0x10] sm:$0xff]
        %v329 = vld [vmem:[%s291 + $0x18] sm:$0xff]
        %v330 = vld [vmem:[%s291 + $0x20] sm:$0xff]
        %v331 = vld [vmem:[%s291 + $0x28] sm:$0xff]
        %v332 = vld [vmem:[%s291 + $0x30] sm:$0xff]
        %v333 = vld [vmem:[%s291 + $0x38] sm:$0xff]
        %v334 = vld [vmem:[%s291 + $0x40] sm:$0xff]
        %v335 = vld [vmem:[%s291 + $0x48] sm:$0xff]
        %v336 = vld [vmem:[%s291 + $0x50] sm:$0xff]
        %v337 = vld [vmem:[%s291 + $0x58] sm:$0xff]
        %v338 = vld [vmem:[%s291 + $0x60] sm:$0xff]
        %v339 = vld [vmem:[%s291 + $0x68] sm:$0xff]
        %v340 = vld [vmem:[%s291 + $0x70] sm:$0xff]
        %v341 = vld [vmem:[%s291 + $0x78] sm:$0xff]
        %v342 = vld [vmem:[%s1] sm:$0xff]
        %v343 = vld [vmem:[%s2] sm:$0xff]
        %345 = vset.pattern.permute.xlu0 0
        %346 = vperm.xlu0 %345, %v343
        %v347 = vpop.permute.xlu0 %346
        %vm349 = vcmask 261120
        %v351 = vsel %vm349, %v342, 0
        %353 = vmatprep.subr.mxu0 %v327
        %354 = vmatpush1.msra.mxu0 %v326
        %355 = vmatprep.subr.mxu0 %v331
        %356 = vmatpush1.msra.mxu0 %v330
        %357 = vmatprep.subr.mxu0 %v335
        %358 = vmatpush1.msra.mxu0 %v334
        %359 = vmatprep.subr.mxu0 %v339
        %360 = vmatpush1.msra.mxu0 %v338
        %361 = vmatprep.subr.mxu0 0.0
        %362 = vmatpush1.msra.mxu0 0.0
        %363 = vmatprep.subr.mxu0 0.0
        %364 = vmatpush1.msra.mxu0 0.0
        %365 = vmatprep.subr.mxu0 0.0
        %366 = vmatpush1.msra.mxu0 0.0
        %367 = vmatprep.subr.mxu0 0.0
        %368 = vmatpush1.msra.mxu0 0.0
        %369 = vmatprep.subr.mxu0 0.0
        %370 = vmatpush1.msra.mxu0 0.0
        %371 = vmatprep.subr.mxu0 0.0
        %372 = vmatpush1.msra.mxu0 0.0
        %373 = vmatprep.subr.mxu0 0.0
        %374 = vmatpush1.msra.mxu0 0.0
        %375 = vmatprep.subr.mxu0 0.0
        %376 = vmatpush1.msra.mxu0 0.0
        %377 = vmatprep.subr.mxu0 0.0
        %378 = vmatpush1.msra.mxu0 0.0
        %379 = vmatprep.subr.mxu0 0.0
        %380 = vmatpush1.msra.mxu0 0.0
        %381 = vmatprep.subr.mxu0 0.0
        %382 = vmatpush1.msra.mxu0 0.0
        %383 = vmatprep.subr.mxu0 0.0
        %384 = vmatpush1.msra.mxu0 0.0
        %385 = vmatprep.subr.mxu0 0.0
        %386 = vmatpush1.msra.mxu0 0.0
        %387 = vmatprep.subr.mxu0 0.0
        %388 = vmatpush1.msra.mxu0 0.0
        %389 = vmatprep.subr.mxu0 0.0
        %390 = vmatpush1.msra.mxu0 0.0
        %391 = vmatprep.subr.mxu0 0.0
        %392 = vmatpush1.msra.mxu0 0.0
        %393 = vmatprep.subr.mxu0 0.0
        %394 = vmatpush1.msra.mxu0 0.0
        %395 = vmatprep.subr.mxu0 0.0
        %396 = vmatpush1.msra.mxu0 0.0
        %397 = vmatprep.subr.mxu0 0.0
        %398 = vmatpush1.msra.mxu0 0.0
        %399 = vmatprep.subr.mxu0 0.0
        %400 = vmatpush1.msra.mxu0 0.0
        %401 = vmatprep.subr.mxu0 0.0
        %402 = vmatpush1.msra.mxu0 0.0
        %403 = vmatprep.subr.mxu0 0.0
        %404 = vmatpush1.msra.mxu0 0.0
        %405 = vmatprep.subr.mxu0 0.0
        %406 = vmatpush1.msra.mxu0 0.0
        %407 = vmatprep.subr.mxu0 0.0
        %408 = vmatpush1.msra.mxu0 0.0
        %409 = vmatprep.subr.mxu0 0.0
        %410 = vmatpush1.msra.mxu0 0.0
        %411 = vmatprep.subr.mxu0 0.0
        %412 = vmatpush1.msra.mxu0 0.0
        %413 = vmatprep.subr.mxu0 0.0
        %414 = vmatpush1.msra.mxu0 0.0
        %415 = vmatprep.subr.mxu0 0.0
        %416 = vmatpush1.msra.mxu0 0.0
        %417 = vmatprep.mubr.f32.mxu0 0.0
        %418 = vmatmul.mubr.f32.gmra.mrb[0].mxu0 %v351
        %v419 = vpop.f32.mrb[0].mxu0
        %v420 = vadd.f32 %v347, %v419
        %v421 = vpop.f32.mrb[0].mxu0
        %v422 = vadd.f32 %v347, %v421
        %423 = vdwg.mxu0
        %424 = vmatprep.subr.mxu0 %v329
        %425 = vmatpush1.msra.mxu0 %v328
        %426 = vmatprep.subr.mxu0 %v333
        %427 = vmatpush1.msra.mxu0 %v332
        %428 = vmatprep.subr.mxu0 %v337
        %429 = vmatpush1.msra.mxu0 %v336
        %430 = vmatprep.subr.mxu0 %v341
        %431 = vmatpush1.msra.mxu0 %v340
        %432 = vmatprep.subr.mxu0 0.0
        %433 = vmatpush1.msra.mxu0 0.0
        %434 = vmatprep.subr.mxu0 0.0
        %435 = vmatpush1.msra.mxu0 0.0
        %436 = vmatprep.subr.mxu0 0.0
        %437 = vmatpush1.msra.mxu0 0.0
        %438 = vmatprep.subr.mxu0 0.0
        %439 = vmatpush1.msra.mxu0 0.0
        %440 = vmatprep.subr.mxu0 0.0
        %441 = vmatpush1.msra.mxu0 0.0
        %442 = vmatprep.subr.mxu0 0.0
        %443 = vmatpush1.msra.mxu0 0.0
        %444 = vmatprep.subr.mxu0 0.0
        %445 = vmatpush1.msra.mxu0 0.0
        %446 = vmatprep.subr.mxu0 0.0
        %447 = vmatpush1.msra.mxu0 0.0
        %448 = vmatprep.subr.mxu0 0.0
        %449 = vmatpush1.msra.mxu0 0.0
        %450 = vmatprep.subr.mxu0 0.0
        %451 = vmatpush1.msra.mxu0 0.0
        %452 = vmatprep.subr.mxu0 0.0
        %453 = vmatpush1.msra.mxu0 0.0
        %454 = vmatprep.subr.mxu0 0.0
        %455 = vmatpush1.msra.mxu0 0.0
        %456 = vmatprep.subr.mxu0 0.0
        %457 = vmatpush1.msra.mxu0 0.0
        %458 = vmatprep.subr.mxu0 0.0
        %459 = vmatpush1.msra.mxu0 0.0
        %460 = vmatprep.subr.mxu0 0.0
        %461 = vmatpush1.msra.mxu0 0.0
        %462 = vmatprep.subr.mxu0 0.0
        %463 = vmatpush1.msra.mxu0 0.0
        %464 = vmatprep.subr.mxu0 0.0
        %465 = vmatpush1.msra.mxu0 0.0
        %466 = vmatprep.subr.mxu0 0.0
        %467 = vmatpush1.msra.mxu0 0.0
        %468 = vmatprep.subr.mxu0 0.0
        %469 = vmatpush1.msra.mxu0 0.0
        %470 = vmatprep.subr.mxu0 0.0
        %471 = vmatpush1.msra.mxu0 0.0
        %472 = vmatprep.subr.mxu0 0.0
        %473 = vmatpush1.msra.mxu0 0.0
        %474 = vmatprep.subr.mxu0 0.0
        %475 = vmatpush1.msra.mxu0 0.0
        %476 = vmatprep.subr.mxu0 0.0
        %477 = vmatpush1.msra.mxu0 0.0
        %478 = vmatprep.subr.mxu0 0.0
        %479 = vmatpush1.msra.mxu0 0.0
        %480 = vmatprep.subr.mxu0 0.0
        %481 = vmatpush1.msra.mxu0 0.0
        %482 = vmatprep.subr.mxu0 0.0
        %483 = vmatpush1.msra.mxu0 0.0
        %484 = vmatprep.subr.mxu0 0.0
        %485 = vmatpush1.msra.mxu0 0.0
        %486 = vmatprep.subr.mxu0 0.0
        %487 = vmatpush1.msra.mxu0 0.0
        %488 = vmatprep.mubr.f32.mxu0 0.0
        %489 = vmatmul.mubr.f32.gmra.mrb[0].mxu0 %v351
        %v490 = vpop.f32.mrb[0].mxu0
        %v491 = vadd.f32 %v347, %v490
        %v492 = vpop.f32.mrb[0].mxu0
        %v493 = vadd.f32 %v347, %v492
        %494 = vdwg.mxu0
        %v495 = vmax.f32 %v420, 0.0
        %v496 = vmax.f32 %v422, 0.0
        %v497 = vmax.f32 %v491, 0.0
        %v498 = vmax.f32 %v493, 0.0
        %499 = vrot.lane.b32.xlu0 %v495, 17
        %v500 = vpop.permute.xlu0 %499
        %501 = vrot.lane.b32.xlu0 %v496, 17
        %v502 = vpop.permute.xlu0 %501
        %503 = vrot.lane.b32.xlu0 %v497, 17
        %v504 = vpop.permute.xlu0 %503
        %505 = vrot.lane.b32.xlu0 %v498, 17
        %v506 = vpop.permute.xlu0 %505
        %v507 = vlaneseq
        %v508 = vand.u32 %v507, 127
        %vm509 = vcmp.lt.s32.totalorder %v508, 17
        %v510 = vsel %vm509, %v504, %v506
        %v511 = vsel %vm509, %v502, %v504
        %v512 = vsel %vm509, %v500, %v502
        %v513 = vsel %vm509, %v506, %v500
        %v514 = vld [vmem:[%s7] sm:$0xf]
        %v516 = vlaneseq
        %v517 = vshrl.u32 %v516, 7
        %v518 = vsub.s32 0, %v517
        %v519 = vrot.slane %v514, %v518
        %v520 = vlaneseq
        %v521 = vshrl.u32 %v520, 7
        %v522 = vsub.s32 1, %v521
        %v523 = vrot.slane %v514, %v522
        %v524 = vlaneseq
        %v525 = vshrl.u32 %v524, 7
        %v526 = vsub.s32 2, %v525
        %v527 = vrot.slane %v514, %v526
        %v528 = vlaneseq
        %v529 = vshrl.u32 %v528, 7
        %v530 = vsub.s32 3, %v529
        %v531 = vrot.slane %v514, %v530
        %v536 = vmul.f32 %v513, %v519
        %v537 = vmul.f32 %v512, %v523
        %v538 = vmul.f32 %v511, %v527
        %v539 = vmul.f32 %v510, %v531
        %540 = vst [vmem:[#allocation2] sm:$0xff] %v536
        %541 = vst [vmem:[#allocation2 + $0x8] sm:$0xff] %v537
        %542 = vst [vmem:[#allocation2 + $0x10] sm:$0xff] %v538
        %543 = vst [vmem:[#allocation2 + $0x18] sm:$0xff] %v539
        %544 = vrot.lane.b32.xlu0 %v495, 16
        %v545 = vpop.permute.xlu0 %544
        %546 = vrot.lane.b32.xlu0 %v496, 16
        %v547 = vpop.permute.xlu0 %546
        %548 = vrot.lane.b32.xlu0 %v497, 16
        %v549 = vpop.permute.xlu0 %548
        %550 = vrot.lane.b32.xlu0 %v498, 16
        %v551 = vpop.permute.xlu0 %550
        %vm552 = vcmp.lt.s32.totalorder %v508, 16
        %v553 = vsel %vm552, %v549, %v551
        %v554 = vsel %vm552, %v547, %v549
        %v555 = vsel %vm552, %v545, %v547
        %v556 = vsel %vm552, %v551, %v545
        %s557 = scalar_lea.vmem %s7, 4
        %v558 = vld [vmem:[%s557] sm:$0xf]
        %v560 = vlaneseq
        %v561 = vshrl.u32 %v560, 7
        %v562 = vsub.s32 0, %v561
        %v563 = vrot.slane %v558, %v562
        %v564 = vlaneseq
        %v565 = vshrl.u32 %v564, 7
        %v566 = vsub.s32 1, %v565
        %v567 = vrot.slane %v558, %v566
        %v568 = vlaneseq
        %v569 = vshrl.u32 %v568, 7
        %v570 = vsub.s32 2, %v569
        %v571 = vrot.slane %v558, %v570
        %v572 = vlaneseq
        %v573 = vshrl.u32 %v572, 7
        %v574 = vsub.s32 3, %v573
        %v575 = vrot.slane %v558, %v574
        %v580 = vmul.f32 %v556, %v563
        %v581 = vmul.f32 %v555, %v567
        %v582 = vmul.f32 %v554, %v571
        %v583 = vmul.f32 %v553, %v575
        %584 = vst [vmem:[#allocation2 + $0x20] sm:$0xff] %v580
        %585 = vst [vmem:[#allocation2 + $0x28] sm:$0xff] %v581
        %586 = vst [vmem:[#allocation2 + $0x30] sm:$0xff] %v582
        %587 = vst [vmem:[#allocation2 + $0x38] sm:$0xff] %v583
        %588 = vrot.lane.b32.xlu0 %v495, 15
        %v589 = vpop.permute.xlu0 %588
        %590 = vrot.lane.b32.xlu0 %v496, 15
        %v591 = vpop.permute.xlu0 %590
        %592 = vrot.lane.b32.xlu0 %v497, 15
        %v593 = vpop.permute.xlu0 %592
        %594 = vrot.lane.b32.xlu0 %v498, 15
        %v595 = vpop.permute.xlu0 %594
        %vm596 = vcmp.lt.s32.totalorder %v508, 15
        %v597 = vsel %vm596, %v593, %v595
        %v598 = vsel %vm596, %v591, %v593
        %v599 = vsel %vm596, %v589, %v591
        %v600 = vsel %vm596, %v595, %v589
        %s601 = scalar_lea.vmem %s7, 8
        %v602 = vld [vmem:[%s601] sm:$0xf]
        %v604 = vlaneseq
        %v605 = vshrl.u32 %v604, 7
        %v606 = vsub.s32 0, %v605
        %v607 = vrot.slane %v602, %v606
        %v608 = vlaneseq
        %v609 = vshrl.u32 %v608, 7
        %v610 = vsub.s32 1, %v609
        %v611 = vrot.slane %v602, %v610
        %v612 = vlaneseq
        %v613 = vshrl.u32 %v612, 7
        %v614 = vsub.s32 2, %v613
        %v615 = vrot.slane %v602, %v614
        %v616 = vlaneseq
        %v617 = vshrl.u32 %v616, 7
        %v618 = vsub.s32 3, %v617
        %v619 = vrot.slane %v602, %v618
        %v624 = vmul.f32 %v600, %v607
        %v625 = vmul.f32 %v599, %v611
        %v626 = vmul.f32 %v598, %v615
        %v627 = vmul.f32 %v597, %v619
        %628 = vst [vmem:[#allocation2 + $0x40] sm:$0xff] %v624
        %629 = vst [vmem:[#allocation2 + $0x48] sm:$0xff] %v625
        %630 = vst [vmem:[#allocation2 + $0x50] sm:$0xff] %v626
        %631 = vst [vmem:[#allocation2 + $0x58] sm:$0xff] %v627
        %632 = vrot.lane.b32.xlu0 %v495, 1
        %v633 = vpop.permute.xlu0 %632
        %634 = vrot.lane.b32.xlu0 %v496, 1
        %v635 = vpop.permute.xlu0 %634
        %636 = vrot.lane.b32.xlu0 %v497, 1
        %v637 = vpop.permute.xlu0 %636
        %638 = vrot.lane.b32.xlu0 %v498, 1
        %v639 = vpop.permute.xlu0 %638
        %vm640 = vcmp.lt.s32.totalorder %v508, 1
        %v641 = vsel %vm640, %v637, %v639
        %v642 = vsel %vm640, %v635, %v637
        %v643 = vsel %vm640, %v633, %v635
        %v644 = vsel %vm640, %v639, %v633
        %s645 = scalar_lea.vmem %s7, 12
        %v646 = vld [vmem:[%s645] sm:$0xf]
        %v648 = vlaneseq
        %v649 = vshrl.u32 %v648, 7
        %v650 = vsub.s32 0, %v649
        %v651 = vrot.slane %v646, %v650
        %v652 = vlaneseq
        %v653 = vshrl.u32 %v652, 7
        %v654 = vsub.s32 1, %v653
        %v655 = vrot.slane %v646, %v654
        %v656 = vlaneseq
        %v657 = vshrl.u32 %v656, 7
        %v658 = vsub.s32 2, %v657
        %v659 = vrot.slane %v646, %v658
        %v660 = vlaneseq
        %v661 = vshrl.u32 %v660, 7
        %v662 = vsub.s32 3, %v661
        %v663 = vrot.slane %v646, %v662
        %v668 = vmul.f32 %v644, %v651
        %v669 = vmul.f32 %v643, %v655
        %v670 = vmul.f32 %v642, %v659
        %v671 = vmul.f32 %v641, %v663
        %672 = vst [vmem:[#allocation2 + $0x60] sm:$0xff] %v668
        %673 = vst [vmem:[#allocation2 + $0x68] sm:$0xff] %v669
        %674 = vst [vmem:[#allocation2 + $0x70] sm:$0xff] %v670
        %675 = vst [vmem:[#allocation2 + $0x78] sm:$0xff] %v671
        %676 = vst [vmem:[#allocation2 + $0x80] sm:$0xff] %v495
        %677 = vst [vmem:[#allocation2 + $0x88] sm:$0xff] %v496
        %678 = vst [vmem:[#allocation2 + $0x90] sm:$0xff] %v497
        %679 = vst [vmem:[#allocation2 + $0x98] sm:$0xff] %v498
        %680 = vrot.lane.b32.xlu0 %v495, 127
        %v681 = vpop.permute.xlu0 %680
        %682 = vrot.lane.b32.xlu0 %v496, 127
        %v683 = vpop.permute.xlu0 %682
        %684 = vrot.lane.b32.xlu0 %v497, 127
        %v685 = vpop.permute.xlu0 %684
        %686 = vrot.lane.b32.xlu0 %v498, 127
        %v687 = vpop.permute.xlu0 %686
        %vm688 = vcmp.lt.s32.totalorder %v508, 127
        %v689 = vsel %vm688, %v685, %v687
        %v690 = vsel %vm688, %v683, %v685
        %v691 = vsel %vm688, %v681, %v683
        %v692 = vsel %vm688, %v687, %v681
        %s693 = scalar_lea.vmem %s7, 20
        %v694 = vld [vmem:[%s693] sm:$0xf]
        %v696 = vlaneseq
        %v697 = vshrl.u32 %v696, 7
        %v698 = vsub.s32 0, %v697
        %v699 = vrot.slane %v694, %v698
        %v700 = vlaneseq
        %v701 = vshrl.u32 %v700, 7
        %v702 = vsub.s32 1, %v701
        %v703 = vrot.slane %v694, %v702
        %v704 = vlaneseq
        %v705 = vshrl.u32 %v704, 7
        %v706 = vsub.s32 2, %v705
        %v707 = vrot.slane %v694, %v706
        %v708 = vlaneseq
        %v709 = vshrl.u32 %v708, 7
        %v710 = vsub.s32 3, %v709
        %v711 = vrot.slane %v694, %v710
        %v716 = vmul.f32 %v691, %v699
        %v717 = vmul.f32 %v690, %v703
        %v718 = vmul.f32 %v689, %v707
        %v719 = vmul.f32 %v692, %v711
        %720 = vst [vmem:[#allocation2 + $0xa0] sm:$0xff] %v716
        %721 = vst [vmem:[#allocation2 + $0xa8] sm:$0xff] %v717
        %722 = vst [vmem:[#allocation2 + $0xb0] sm:$0xff] %v718
        %723 = vst [vmem:[#allocation2 + $0xb8] sm:$0xff] %v719
        %724 = vrot.lane.b32.xlu0 %v495, 113
        %v725 = vpop.permute.xlu0 %724
        %726 = vrot.lane.b32.xlu0 %v496, 113
        %v727 = vpop.permute.xlu0 %726
        %728 = vrot.lane.b32.xlu0 %v497, 113
        %v729 = vpop.permute.xlu0 %728
        %730 = vrot.lane.b32.xlu0 %v498, 113
        %v731 = vpop.permute.xlu0 %730
        %vm732 = vcmp.lt.s32.totalorder %v508, 113
        %v733 = vsel %vm732, %v729, %v731
        %v734 = vsel %vm732, %v727, %v729
        %v735 = vsel %vm732, %v725, %v727
        %v736 = vsel %vm732, %v731, %v725
        %s737 = scalar_lea.vmem %s7, 24
        %v738 = vld [vmem:[%s737] sm:$0xf]
        %v740 = vlaneseq
        %v741 = vshrl.u32 %v740, 7
        %v742 = vsub.s32 0, %v741
        %v743 = vrot.slane %v738, %v742
        %v744 = vlaneseq
        %v745 = vshrl.u32 %v744, 7
        %v746 = vsub.s32 1, %v745
        %v747 = vrot.slane %v738, %v746
        %v748 = vlaneseq
        %v749 = vshrl.u32 %v748, 7
        %v750 = vsub.s32 2, %v749
        %v751 = vrot.slane %v738, %v750
        %v752 = vlaneseq
        %v753 = vshrl.u32 %v752, 7
        %v754 = vsub.s32 3, %v753
        %v755 = vrot.slane %v738, %v754
        %v760 = vmul.f32 %v735, %v743
        %v761 = vmul.f32 %v734, %v747
        %v762 = vmul.f32 %v733, %v751
        %v763 = vmul.f32 %v736, %v755
        %764 = vst [vmem:[#allocation2 + $0xc0] sm:$0xff] %v760
        %765 = vst [vmem:[#allocation2 + $0xc8] sm:$0xff] %v761
        %766 = vst [vmem:[#allocation2 + $0xd0] sm:$0xff] %v762
        %767 = vst [vmem:[#allocation2 + $0xd8] sm:$0xff] %v763
        %768 = vrot.lane.b32.xlu0 %v495, 112
        %v769 = vpop.permute.xlu0 %768
        %770 = vrot.lane.b32.xlu0 %v496, 112
        %v771 = vpop.permute.xlu0 %770
        %772 = vrot.lane.b32.xlu0 %v497, 112
        %v773 = vpop.permute.xlu0 %772
        %774 = vrot.lane.b32.xlu0 %v498, 112
        %v775 = vpop.permute.xlu0 %774
        %vm776 = vcmp.lt.s32.totalorder %v508, 112
        %v777 = vsel %vm776, %v773, %v775
        %v778 = vsel %vm776, %v771, %v773
        %v779 = vsel %vm776, %v769, %v771
        %v780 = vsel %vm776, %v775, %v769
        %s781 = scalar_lea.vmem %s7, 28
        %v782 = vld [vmem:[%s781] sm:$0xf]
        %v784 = vlaneseq
        %v785 = vshrl.u32 %v784, 7
        %v786 = vsub.s32 0, %v785
        %v787 = vrot.slane %v782, %v786
        %v788 = vlaneseq
        %v789 = vshrl.u32 %v788, 7
        %v790 = vsub.s32 1, %v789
        %v791 = vrot.slane %v782, %v790
        %v792 = vlaneseq
        %v793 = vshrl.u32 %v792, 7
        %v794 = vsub.s32 2, %v793
        %v795 = vrot.slane %v782, %v794
        %v796 = vlaneseq
        %v797 = vshrl.u32 %v796, 7
        %v798 = vsub.s32 3, %v797
        %v799 = vrot.slane %v782, %v798
        %v804 = vmul.f32 %v779, %v787
        %v805 = vmul.f32 %v778, %v791
        %v806 = vmul.f32 %v777, %v795
        %v807 = vmul.f32 %v780, %v799
        %808 = vst [vmem:[#allocation2 + $0xe0] sm:$0xff] %v804
        %809 = vst [vmem:[#allocation2 + $0xe8] sm:$0xff] %v805
        %810 = vst [vmem:[#allocation2 + $0xf0] sm:$0xff] %v806
        %811 = vst [vmem:[#allocation2 + $0xf8] sm:$0xff] %v807
        %812 = vrot.lane.b32.xlu0 %v495, 111
        %v813 = vpop.permute.xlu0 %812
        %814 = vrot.lane.b32.xlu0 %v496, 111
        %v815 = vpop.permute.xlu0 %814
        %816 = vrot.lane.b32.xlu0 %v497, 111
        %v817 = vpop.permute.xlu0 %816
        %818 = vrot.lane.b32.xlu0 %v498, 111
        %v819 = vpop.permute.xlu0 %818
        %vm820 = vcmp.lt.s32.totalorder %v508, 111
        %v821 = vsel %vm820, %v817, %v819
        %v822 = vsel %vm820, %v815, %v817
        %v823 = vsel %vm820, %v813, %v815
        %v824 = vsel %vm820, %v819, %v813
        %s825 = scalar_lea.vmem %s7, 32
        %v826 = vld [vmem:[%s825] sm:$0xf]
        %v828 = vlaneseq
        %v829 = vshrl.u32 %v828, 7
        %v830 = vsub.s32 0, %v829
        %v831 = vrot.slane %v826, %v830
        %v832 = vlaneseq
        %v833 = vshrl.u32 %v832, 7
        %v834 = vsub.s32 1, %v833
        %v835 = vrot.slane %v826, %v834
        %v836 = vlaneseq
        %v837 = vshrl.u32 %v836, 7
        %v838 = vsub.s32 2, %v837
        %v839 = vrot.slane %v826, %v838
        %v840 = vlaneseq
        %v841 = vshrl.u32 %v840, 7
        %v842 = vsub.s32 3, %v841
        %v843 = vrot.slane %v826, %v842
        %v848 = vmul.f32 %v823, %v831
        %v849 = vmul.f32 %v822, %v835
        %v850 = vmul.f32 %v821, %v839
        %v851 = vmul.f32 %v824, %v843
        %852 = vst [vmem:[#allocation2 + $0x100] sm:$0xff] %v848
        %853 = vst [vmem:[#allocation2 + $0x108] sm:$0xff] %v849
        %854 = vst [vmem:[#allocation2 + $0x110] sm:$0xff] %v850
        %855 = vst [vmem:[#allocation2 + $0x118] sm:$0xff] %v851
        %v856 = vld [vmem:[%s3] sm:$0xff]
        %v857 = vld [vmem:[#allocation2] sm:$0xff]
        %v858 = vld [vmem:[#allocation2 + $0x8] sm:$0xff]
        %v859 = vld [vmem:[#allocation2 + $0x10] sm:$0xff]
        %v860 = vld [vmem:[#allocation2 + $0x18] sm:$0xff]
        %v861 = vld [vmem:[#allocation2 + $0x20] sm:$0xff]
        %v862 = vld [vmem:[#allocation2 + $0x28] sm:$0xff]
        %v863 = vld [vmem:[#allocation2 + $0x30] sm:$0xff]
        %v864 = vld [vmem:[#allocation2 + $0x38] sm:$0xff]
        %v865 = vld [vmem:[#allocation2 + $0x40] sm:$0xff]
        %v866 = vld [vmem:[#allocation2 + $0x48] sm:$0xff]
        %v867 = vld [vmem:[#allocation2 + $0x50] sm:$0xff]
        %v868 = vld [vmem:[#allocation2 + $0x58] sm:$0xff]
        %v869 = vld [vmem:[#allocation2 + $0x60] sm:$0xff]
        %v870 = vld [vmem:[#allocation2 + $0x68] sm:$0xff]
        %v871 = vld [vmem:[#allocation2 + $0x70] sm:$0xff]
        %v872 = vld [vmem:[#allocation2 + $0x78] sm:$0xff]
        %v873 = vld [vmem:[#allocation2 + $0x80] sm:$0xff]
        %v874 = vld [vmem:[#allocation2 + $0x88] sm:$0xff]
        %v875 = vld [vmem:[#allocation2 + $0x90] sm:$0xff]
        %v876 = vld [vmem:[#allocation2 + $0x98] sm:$0xff]
        %v877 = vld [vmem:[#allocation2 + $0xa0] sm:$0xff]
        %v878 = vld [vmem:[#allocation2 + $0xa8] sm:$0xff]
        %v879 = vld [vmem:[#allocation2 + $0xb0] sm:$0xff]
        %v880 = vld [vmem:[#allocation2 + $0xb8] sm:$0xff]
        %v881 = vld [vmem:[#allocation2 + $0xc0] sm:$0xff]
        %v882 = vld [vmem:[#allocation2 + $0xc8] sm:$0xff]
        %v883 = vld [vmem:[#allocation2 + $0xd0] sm:$0xff]
        %v884 = vld [vmem:[#allocation2 + $0xd8] sm:$0xff]
        %v885 = vld [vmem:[#allocation2 + $0xe0] sm:$0xff]
        %v886 = vld [vmem:[#allocation2 + $0xe8] sm:$0xff]
        %v887 = vld [vmem:[#allocation2 + $0xf0] sm:$0xff]
        %v888 = vld [vmem:[#allocation2 + $0xf8] sm:$0xff]
        %v889 = vld [vmem:[#allocation2 + $0x100] sm:$0xff]
        %v890 = vld [vmem:[#allocation2 + $0x108] sm:$0xff]
        %v891 = vld [vmem:[#allocation2 + $0x110] sm:$0xff]
        %v892 = vld [vmem:[#allocation2 + $0x118] sm:$0xff]
        %v893 = vld [vmem:[%s4] sm:$0xff]
        %895 = vset.pattern.permute.xlu0 0
        %896 = vperm.xlu0 %895, %v893
        %v897 = vpop.permute.xlu0 %896
        %vm899 = vcmask 588800
        %v901 = vsel %vm899, %v856, 0
        %903 = vmatprep.subr.mxu0 %v858
        %904 = vmatpush1.msra.mxu0 %v857
        %905 = vmatprep.subr.mxu0 %v862
        %906 = vmatpush1.msra.mxu0 %v861
        %907 = vmatprep.subr.mxu0 %v866
        %908 = vmatpush1.msra.mxu0 %v865
        %909 = vmatprep.subr.mxu0 %v870
        %910 = vmatpush1.msra.mxu0 %v869
        %911 = vmatprep.subr.mxu0 %v874
        %912 = vmatpush1.msra.mxu0 %v873
        %913 = vmatprep.subr.mxu0 %v878
        %914 = vmatpush1.msra.mxu0 %v877
        %915 = vmatprep.subr.mxu0 %v882
        %916 = vmatpush1.msra.mxu0 %v881
        %917 = vmatprep.subr.mxu0 %v886
        %918 = vmatpush1.msra.mxu0 %v885
        %919 = vmatprep.subr.mxu0 %v890
        %920 = vmatpush1.msra.mxu0 %v889
        %921 = vmatprep.subr.mxu0 0.0
        %922 = vmatpush1.msra.mxu0 0.0
        %923 = vmatprep.subr.mxu0 0.0
        %924 = vmatpush1.msra.mxu0 0.0
        %925 = vmatprep.subr.mxu0 0.0
        %926 = vmatpush1.msra.mxu0 0.0
        %927 = vmatprep.subr.mxu0 0.0
        %928 = vmatpush1.msra.mxu0 0.0
        %929 = vmatprep.subr.mxu0 0.0
        %930 = vmatpush1.msra.mxu0 0.0
        %931 = vmatprep.subr.mxu0 0.0
        %932 = vmatpush1.msra.mxu0 0.0
        %933 = vmatprep.subr.mxu0 0.0
        %934 = vmatpush1.msra.mxu0 0.0
        %935 = vmatprep.subr.mxu0 0.0
        %936 = vmatpush1.msra.mxu0 0.0
        %937 = vmatprep.subr.mxu0 0.0
        %938 = vmatpush1.msra.mxu0 0.0
        %939 = vmatprep.subr.mxu0 0.0
        %940 = vmatpush1.msra.mxu0 0.0
        %941 = vmatprep.subr.mxu0 0.0
        %942 = vmatpush1.msra.mxu0 0.0
        %943 = vmatprep.subr.mxu0 0.0
        %944 = vmatpush1.msra.mxu0 0.0
        %945 = vmatprep.subr.mxu0 0.0
        %946 = vmatpush1.msra.mxu0 0.0
        %947 = vmatprep.subr.mxu0 0.0
        %948 = vmatpush1.msra.mxu0 0.0
        %949 = vmatprep.subr.mxu0 0.0
        %950 = vmatpush1.msra.mxu0 0.0
        %951 = vmatprep.subr.mxu0 0.0
        %952 = vmatpush1.msra.mxu0 0.0
        %953 = vmatprep.subr.mxu0 0.0
        %954 = vmatpush1.msra.mxu0 0.0
        %955 = vmatprep.subr.mxu0 0.0
        %956 = vmatpush1.msra.mxu0 0.0
        %957 = vmatprep.subr.mxu0 0.0
        %958 = vmatpush1.msra.mxu0 0.0
        %959 = vmatprep.subr.mxu0 0.0
        %960 = vmatpush1.msra.mxu0 0.0
        %961 = vmatprep.subr.mxu0 0.0
        %962 = vmatpush1.msra.mxu0 0.0
        %963 = vmatprep.subr.mxu0 0.0
        %964 = vmatpush1.msra.mxu0 0.0
        %965 = vmatprep.subr.mxu0 0.0
        %966 = vmatpush1.msra.mxu0 0.0
        %967 = vmatprep.mubr.f32.mxu0 0.0
        %968 = vmatmul.mubr.f32.gmra.mrb[0].mxu0 %v901
        %v969 = vpop.f32.mrb[0].mxu0
        %v970 = vadd.f32 %v897, %v969
        %v971 = vpop.f32.mrb[0].mxu0
        %v972 = vadd.f32 %v897, %v971
        %973 = vdwg.mxu0
        %974 = vmatprep.subr.mxu0 %v860
        %975 = vmatpush1.msra.mxu0 %v859
        %976 = vmatprep.subr.mxu0 %v864
        %977 = vmatpush1.msra.mxu0 %v863
        %978 = vmatprep.subr.mxu0 %v868
        %979 = vmatpush1.msra.mxu0 %v867
        %980 = vmatprep.subr.mxu0 %v872
        %981 = vmatpush1.msra.mxu0 %v871
        %982 = vmatprep.subr.mxu0 %v876
        %983 = vmatpush1.msra.mxu0 %v875
        %984 = vmatprep.subr.mxu0 %v880
        %985 = vmatpush1.msra.mxu0 %v879
        %986 = vmatprep.subr.mxu0 %v884
        %987 = vmatpush1.msra.mxu0 %v883
        %988 = vmatprep.subr.mxu0 %v888
        %989 = vmatpush1.msra.mxu0 %v887
        %990 = vmatprep.subr.mxu0 %v892
        %991 = vmatpush1.msra.mxu0 %v891
        %992 = vmatprep.subr.mxu0 0.0
        %993 = vmatpush1.msra.mxu0 0.0
        %994 = vmatprep.subr.mxu0 0.0
        %995 = vmatpush1.msra.mxu0 0.0
        %996 = vmatprep.subr.mxu0 0.0
        %997 = vmatpush1.msra.mxu0 0.0
        %998 = vmatprep.subr.mxu0 0.0
        %999 = vmatpush1.msra.mxu0 0.0
        %1000 = vmatprep.subr.mxu0 0.0
        %1001 = vmatpush1.msra.mxu0 0.0
        %1002 = vmatprep.subr.mxu0 0.0
        %1003 = vmatpush1.msra.mxu0 0.0
        %1004 = vmatprep.subr.mxu0 0.0
        %1005 = vmatpush1.msra.mxu0 0.0
        %1006 = vmatprep.subr.mxu0 0.0
        %1007 = vmatpush1.msra.mxu0 0.0
        %1008 = vmatprep.subr.mxu0 0.0
        %1009 = vmatpush1.msra.mxu0 0.0
        %1010 = vmatprep.subr.mxu0 0.0
        %1011 = vmatpush1.msra.mxu0 0.0
        %1012 = vmatprep.subr.mxu0 0.0
        %1013 = vmatpush1.msra.mxu0 0.0
        %1014 = vmatprep.subr.mxu0 0.0
        %1015 = vmatpush1.msra.mxu0 0.0
        %1016 = vmatprep.subr.mxu0 0.0
        %1017 = vmatpush1.msra.mxu0 0.0
        %1018 = vmatprep.subr.mxu0 0.0
        %1019 = vmatpush1.msra.mxu0 0.0
        %1020 = vmatprep.subr.mxu0 0.0
        %1021 = vmatpush1.msra.mxu0 0.0
        %1022 = vmatprep.subr.mxu0 0.0
        %1023 = vmatpush1.msra.mxu0 0.0
        %1024 = vmatprep.subr.mxu0 0.0
        %1025 = vmatpush1.msra.mxu0 0.0
        %1026 = vmatprep.subr.mxu0 0.0
        %1027 = vmatpush1.msra.mxu0 0.0
        %1028 = vmatprep.subr.mxu0 0.0
        %1029 = vmatpush1.msra.mxu0 0.0
        %1030 = vmatprep.subr.mxu0 0.0
        %1031 = vmatpush1.msra.mxu0 0.0
        %1032 = vmatprep.subr.mxu0 0.0
        %1033 = vmatpush1.msra.mxu0 0.0
        %1034 = vmatprep.subr.mxu0 0.0
        %1035 = vmatpush1.msra.mxu0 0.0
        %1036 = vmatprep.subr.mxu0 0.0
        %1037 = vmatpush1.msra.mxu0 0.0
        %1038 = vmatprep.mubr.f32.mxu0 0.0
        %1039 = vmatmul.mubr.f32.gmra.mrb[0].mxu0 %v901
        %v1040 = vpop.f32.mrb[0].mxu0
        %v1041 = vadd.f32 %v897, %v1040
        %v1042 = vpop.f32.mrb[0].mxu0
        %v1043 = vadd.f32 %v897, %v1042
        %1044 = vdwg.mxu0
        %v1045 = vmax.f32 %v970, 0.0
        %v1046 = vmax.f32 %v972, 0.0
        %v1047 = vmax.f32 %v1041, 0.0
        %v1048 = vmax.f32 %v1043, 0.0
        %v1049 = vld [vmem:[%s5] sm:$0xff]
        %v1050 = vld [vmem:[%s5 + $0x8] sm:$0xff]
        %v1051 = vld [vmem:[%s5 + $0x10] sm:$0xff]
        %v1052 = vld [vmem:[%s5 + $0x18] sm:$0xff]
        %v1053 = vld [vmem:[%s6] sm:$0xff]
        %v1054 = vld [vmem:[%s6 + $0x8] sm:$0xff]
        %v1055 = vld [vmem:[%s6 + $0x10] sm:$0xff]
        %v1056 = vld [vmem:[%s6 + $0x18] sm:$0xff]
        %1058 = vset.pattern.permute.xlu0 0
        %1059 = vperm.xlu0 %1058, %v1053
        %v1060 = vpop.permute.xlu0 %1059
        %1063 = vset.pattern.permute.xlu0 0
        %1064 = vperm.xlu0 %1063, %v1054
        %v1065 = vpop.permute.xlu0 %1064
        %1068 = vset.pattern.permute.xlu0 0
        %1069 = vperm.xlu0 %1068, %v1055
        %v1070 = vpop.permute.xlu0 %1069
        %1073 = vset.pattern.permute.xlu0 0
        %1074 = vperm.xlu0 %1073, %v1056
        %v1075 = vpop.permute.xlu0 %1074
        %vm1077 = vcmask 64512
        %v1079 = vsel %vm1077, %v1049, 0
        %v1082 = vsel %vm1077, %v1050, 0
        %v1085 = vsel %vm1077, %v1051, 0
        %v1088 = vsel %vm1077, %v1052, 0
        %1090 = vmatprep.subr.mxu0 %v1046
        %1091 = vmatpush1.msra.mxu0 %v1045
        %1092 = vmatprep.subr.mxu0 0.0
        %1093 = vmatpush1.msra.mxu0 0.0
        %1094 = vmatprep.subr.mxu0 0.0
        %1095 = vmatpush1.msra.mxu0 0.0
        %1096 = vmatprep.subr.mxu0 0.0
        %1097 = vmatpush1.msra.mxu0 0.0
        %1098 = vmatprep.subr.mxu0 0.0
        %1099 = vmatpush1.msra.mxu0 0.0
        %1100 = vmatprep.subr.mxu0 0.0
        %1101 = vmatpush1.msra.mxu0 0.0
        %1102 = vmatprep.subr.mxu0 0.0
        %1103 = vmatpush1.msra.mxu0 0.0
        %1104 = vmatprep.subr.mxu0 0.0
        %1105 = vmatpush1.msra.mxu0 0.0
        %1106 = vmatprep.subr.mxu0 0.0
        %1107 = vmatpush1.msra.mxu0 0.0
        %1108 = vmatprep.subr.mxu0 0.0
        %1109 = vmatpush1.msra.mxu0 0.0
        %1110 = vmatprep.subr.mxu0 0.0
        %1111 = vmatpush1.msra.mxu0 0.0
        %1112 = vmatprep.subr.mxu0 0.0
        %1113 = vmatpush1.msra.mxu0 0.0
        %1114 = vmatprep.subr.mxu0 0.0
        %1115 = vmatpush1.msra.mxu0 0.0
        %1116 = vmatprep.subr.mxu0 0.0
        %1117 = vmatpush1.msra.mxu0 0.0
        %1118 = vmatprep.subr.mxu0 0.0
        %1119 = vmatpush1.msra.mxu0 0.0
        %1120 = vmatprep.subr.mxu0 0.0
        %1121 = vmatpush1.msra.mxu0 0.0
        %1122 = vmatprep.subr.mxu0 0.0
        %1123 = vmatpush1.msra.mxu0 0.0
        %1124 = vmatprep.subr.mxu0 0.0
        %1125 = vmatpush1.msra.mxu0 0.0
        %1126 = vmatprep.subr.mxu0 0.0
        %1127 = vmatpush1.msra.mxu0 0.0
        %1128 = vmatprep.subr.mxu0 0.0
        %1129 = vmatpush1.msra.mxu0 0.0
        %1130 = vmatprep.subr.mxu0 0.0
        %1131 = vmatpush1.msra.mxu0 0.0
        %1132 = vmatprep.subr.mxu0 0.0
        %1133 = vmatpush1.msra.mxu0 0.0
        %1134 = vmatprep.subr.mxu0 0.0
        %1135 = vmatpush1.msra.mxu0 0.0
        %1136 = vmatprep.subr.mxu0 0.0
        %1137 = vmatpush1.msra.mxu0 0.0
        %1138 = vmatprep.subr.mxu0 0.0
        %1139 = vmatpush1.msra.mxu0 0.0
        %1140 = vmatprep.subr.mxu0 0.0
        %1141 = vmatpush1.msra.mxu0 0.0
        %1142 = vmatprep.subr.mxu0 0.0
        %1143 = vmatpush1.msra.mxu0 0.0
        %1144 = vmatprep.subr.mxu0 0.0
        %1145 = vmatpush1.msra.mxu0 0.0
        %1146 = vmatprep.subr.mxu0 0.0
        %1147 = vmatpush1.msra.mxu0 0.0
        %1148 = vmatprep.subr.mxu0 0.0
        %1149 = vmatpush1.msra.mxu0 0.0
        %1150 = vmatprep.subr.mxu0 0.0
        %1151 = vmatpush1.msra.mxu0 0.0
        %1152 = vmatprep.subr.mxu0 0.0
        %1153 = vmatpush1.msra.mxu0 0.0
        %1154 = vmatprep.mubr.f32.mxu0 0.0
        %1155 = vmatmul.mubr.f32.gmra.mrb[0].mxu0 %v1079
        %v1156 = vpop.f32.mrb[0].mxu0
        %v1157 = vadd.f32 %v1060, %v1156
        %v1158 = vpop.f32.mrb[0].mxu0
        %v1159 = vadd.f32 %v1060, %v1158
        %1160 = vmatprep.mubr.f32.mxu0 0.0
        %1161 = vmatmul.mubr.f32.gmra.mrb[0].mxu0 %v1082
        %v1162 = vpop.f32.mrb[0].mxu0
        %v1163 = vadd.f32 %v1065, %v1162
        %v1164 = vpop.f32.mrb[0].mxu0
        %v1165 = vadd.f32 %v1065, %v1164
        %1166 = vmatprep.mubr.f32.mxu0 0.0
        %1167 = vmatmul.mubr.f32.gmra.mrb[0].mxu0 %v1085
        %v1168 = vpop.f32.mrb[0].mxu0
        %v1169 = vadd.f32 %v1070, %v1168
        %v1170 = vpop.f32.mrb[0].mxu0
        %v1171 = vadd.f32 %v1070, %v1170
        %1172 = vmatprep.mubr.f32.mxu0 0.0
        %1173 = vmatmul.mubr.f32.gmra.mrb[0].mxu0 %v1088
        %v1174 = vpop.f32.mrb[0].mxu0
        %v1175 = vadd.f32 %v1075, %v1174
        %v1176 = vpop.f32.mrb[0].mxu0
        %v1177 = vadd.f32 %v1075, %v1176
        %1178 = vdwg.mxu0
        %1179 = vmatprep.subr.mxu0 %v1048
        %1180 = vmatpush1.msra.mxu0 %v1047
        %1181 = vmatprep.subr.mxu0 0.0
        %1182 = vmatpush1.msra.mxu0 0.0
        %1183 = vmatprep.subr.mxu0 0.0
        %1184 = vmatpush1.msra.mxu0 0.0
        %1185 = vmatprep.subr.mxu0 0.0
        %1186 = vmatpush1.msra.mxu0 0.0
        %1187 = vmatprep.subr.mxu0 0.0
        %1188 = vmatpush1.msra.mxu0 0.0
        %1189 = vmatprep.subr.mxu0 0.0
        %1190 = vmatpush1.msra.mxu0 0.0
        %1191 = vmatprep.subr.mxu0 0.0
        %1192 = vmatpush1.msra.mxu0 0.0
        %1193 = vmatprep.subr.mxu0 0.0
        %1194 = vmatpush1.msra.mxu0 0.0
        %1195 = vmatprep.subr.mxu0 0.0
        %1196 = vmatpush1.msra.mxu0 0.0
        %1197 = vmatprep.subr.mxu0 0.0
        %1198 = vmatpush1.msra.mxu0 0.0
        %1199 = vmatprep.subr.mxu0 0.0
        %1200 = vmatpush1.msra.mxu0 0.0
        %1201 = vmatprep.subr.mxu0 0.0
        %1202 = vmatpush1.msra.mxu0 0.0
        %1203 = vmatprep.subr.mxu0 0.0
        %1204 = vmatpush1.msra.mxu0 0.0
        %1205 = vmatprep.subr.mxu0 0.0
        %1206 = vmatpush1.msra.mxu0 0.0
        %1207 = vmatprep.subr.mxu0 0.0
        %1208 = vmatpush1.msra.mxu0 0.0
        %1209 = vmatprep.subr.mxu0 0.0
        %1210 = vmatpush1.msra.mxu0 0.0
        %1211 = vmatprep.subr.mxu0 0.0
        %1212 = vmatpush1.msra.mxu0 0.0
        %1213 = vmatprep.subr.mxu0 0.0
        %1214 = vmatpush1.msra.mxu0 0.0
        %1215 = vmatprep.subr.mxu0 0.0
        %1216 = vmatpush1.msra.mxu0 0.0
        %1217 = vmatprep.subr.mxu0 0.0
        %1218 = vmatpush1.msra.mxu0 0.0
        %1219 = vmatprep.subr.mxu0 0.0
        %1220 = vmatpush1.msra.mxu0 0.0
        %1221 = vmatprep.subr.mxu0 0.0
        %1222 = vmatpush1.msra.mxu0 0.0
        %1223 = vmatprep.subr.mxu0 0.0
        %1224 = vmatpush1.msra.mxu0 0.0
        %1225 = vmatprep.subr.mxu0 0.0
        %1226 = vmatpush1.msra.mxu0 0.0
        %1227 = vmatprep.subr.mxu0 0.0
        %1228 = vmatpush1.msra.mxu0 0.0
        %1229 = vmatprep.subr.mxu0 0.0
        %1230 = vmatpush1.msra.mxu0 0.0
        %1231 = vmatprep.subr.mxu0 0.0
        %1232 = vmatpush1.msra.mxu0 0.0
        %1233 = vmatprep.subr.mxu0 0.0
        %1234 = vmatpush1.msra.mxu0 0.0
        %1235 = vmatprep.subr.mxu0 0.0
        %1236 = vmatpush1.msra.mxu0 0.0
        %1237 = vmatprep.subr.mxu0 0.0
        %1238 = vmatpush1.msra.mxu0 0.0
        %1239 = vmatprep.subr.mxu0 0.0
        %1240 = vmatpush1.msra.mxu0 0.0
        %1241 = vmatprep.subr.mxu0 0.0
        %1242 = vmatpush1.msra.mxu0 0.0
        %1243 = vmatprep.mubr.f32.mxu0 0.0
        %1244 = vmatmul.mubr.f32.gmra.mrb[0].mxu0 %v1079
        %v1245 = vpop.f32.mrb[0].mxu0
        %v1246 = vadd.f32 %v1060, %v1245
        %v1247 = vpop.f32.mrb[0].mxu0
        %v1248 = vadd.f32 %v1060, %v1247
        %1249 = vmatprep.mubr.f32.mxu0 0.0
        %1250 = vmatmul.mubr.f32.gmra.mrb[0].mxu0 %v1082
        %v1251 = vpop.f32.mrb[0].mxu0
        %v1252 = vadd.f32 %v1065, %v1251
        %v1253 = vpop.f32.mrb[0].mxu0
        %v1254 = vadd.f32 %v1065, %v1253
        %1255 = vmatprep.mubr.f32.mxu0 0.0
        %1256 = vmatmul.mubr.f32.gmra.mrb[0].mxu0 %v1085
        %v1257 = vpop.f32.mrb[0].mxu0
        %v1258 = vadd.f32 %v1070, %v1257
        %v1259 = vpop.f32.mrb[0].mxu0
        %v1260 = vadd.f32 %v1070, %v1259
        %1261 = vmatprep.mubr.f32.mxu0 0.0
        %1262 = vmatmul.mubr.f32.gmra.mrb[0].mxu0 %v1088
        %v1263 = vpop.f32.mrb[0].mxu0
        %v1264 = vadd.f32 %v1075, %v1263
        %v1265 = vpop.f32.mrb[0].mxu0
        %v1266 = vadd.f32 %v1075, %v1265
        %1267 = vdwg.mxu0
        %v1268 = vadd.f32 %v1157, %v326
        %v1269 = vadd.f32 %v1159, %v327
        %v1270 = vadd.f32 %v1246, %v328
        %v1271 = vadd.f32 %v1248, %v329
        %v1272 = vadd.f32 %v1163, %v330
        %v1273 = vadd.f32 %v1165, %v331
        %v1274 = vadd.f32 %v1252, %v332
        %v1275 = vadd.f32 %v1254, %v333
        %v1276 = vadd.f32 %v1169, %v334
        %v1277 = vadd.f32 %v1171, %v335
        %v1278 = vadd.f32 %v1258, %v336
        %v1279 = vadd.f32 %v1260, %v337
        %v1280 = vadd.f32 %v1175, %v338
        %v1281 = vadd.f32 %v1177, %v339
        %v1282 = vadd.f32 %v1264, %v340
        %v1283 = vadd.f32 %v1266, %v341
        %v1284 = vmax.f32 %v1268, 0.0
        %v1285 = vmax.f32 %v1269, 0.0
        %v1286 = vmax.f32 %v1270, 0.0
        %v1287 = vmax.f32 %v1271, 0.0
        %v1288 = vmax.f32 %v1272, 0.0
        %v1289 = vmax.f32 %v1273, 0.0
        %v1290 = vmax.f32 %v1274, 0.0
        %v1291 = vmax.f32 %v1275, 0.0
        %v1292 = vmax.f32 %v1276, 0.0
        %v1293 = vmax.f32 %v1277, 0.0
        %v1294 = vmax.f32 %v1278, 0.0
        %v1295 = vmax.f32 %v1279, 0.0
        %v1296 = vmax.f32 %v1280, 0.0
        %v1297 = vmax.f32 %v1281, 0.0
        %v1298 = vmax.f32 %v1282, 0.0
        %v1299 = vmax.f32 %v1283, 0.0
        %1300 = vst [vmem:[%s323] sm:$0xff] %v1284
        %1301 = vst [vmem:[%s323 + $0x8] sm:$0xff] %v1285
        %1302 = vst [vmem:[%s323 + $0x10] sm:$0xff] %v1286
        %1303 = vst [vmem:[%s323 + $0x18] sm:$0xff] %v1287
        %1304 = vst [vmem:[%s323 + $0x20] sm:$0xff] %v1288
        %1305 = vst [vmem:[%s323 + $0x28] sm:$0xff] %v1289
        %1306 = vst [vmem:[%s323 + $0x30] sm:$0xff] %v1290
        %1307 = vst [vmem:[%s323 + $0x38] sm:$0xff] %v1291
        %1308 = vst [vmem:[%s323 + $0x40] sm:$0xff] %v1292
        %1309 = vst [vmem:[%s323 + $0x48] sm:$0xff] %v1293
        %1310 = vst [vmem:[%s323 + $0x50] sm:$0xff] %v1294
        %1311 = vst [vmem:[%s323 + $0x58] sm:$0xff] %v1295
        %1312 = vst [vmem:[%s323 + $0x60] sm:$0xff] %v1296
        %1313 = vst [vmem:[%s323 + $0x68] sm:$0xff] %v1297
        %1314 = vst [vmem:[%s323 + $0x70] sm:$0xff] %v1298
        %1315 = vst [vmem:[%s323 + $0x78] sm:$0xff] %v1299
        %s1316 = sand.u32 %s206, 1
        %s1317 = scalar_lea.sflag [#allocation5], %s1316
        %s1318 = sand.u32 %s206, 1
        %s1319 = smul.addr %s1318, 128
        %s1320 = scalar_lea.vmem [#allocation6], %s1319
        // Predicated region
        $region57: #{tpu_custom_call.1} parent=51 // pred_check
          %p1321 = pneg %p216
        $region58: #{tpu_custom_call.1} parent=51 // pred_check_branch
          %1323 = sbr.rel (%p1321) target = $region60
        $region59: #{tpu_custom_call.1} parent=51 // pred_region
          %s1324 = smul.u32 4, %s25
          %s1326 = ssub.s32 2048, 2048
          %1327 = vsyncadd %s1317, %s1326
          %s1328 = smul.addr %s1324, 128
          %s1329 = scalar_lea.hbm %s8, %s1328
          %s1330 = sshll.u32 %s1320, 4
          %s1331 = int_to_ptr.vmem [resolvable:$true] %s1330
          %1336 = dma.vmem_to_hbm [thread:$0]  %s1331, 2048, %s1329, %s1317, 512, 1024, 32
        $region60: #{tpu_custom_call.1} parent=51 // pred_fallthru
          _
      $region52: #{tpu_custom_call.1} parent=5 // pred_fallthru
        _
      %p1337 = scmp.le.s32.totalorder 2, %s20
      // Predicated region
      $region61: #{tpu_custom_call.1} parent=5 // pred_check
        %p1338 = pneg %p1337
      $region62: #{tpu_custom_call.1} parent=5 // pred_check_branch
        %1340 = sbr.rel (%p1338) target = $region64
      $region63: #{tpu_custom_call.1} parent=5 // pred_region
        %s1341 = ssub.s32 %s20, 2
        // Predicated region
        $region65: #{tpu_custom_call.1} parent=63 // pred_check
          %p1342 = pneg %p222
        $region66: #{tpu_custom_call.1} parent=63 // pred_check_branch
          %1344 = sbr.rel (%p1342) target = $region68
        $region67: #{tpu_custom_call.1} parent=63 // pred_region
          %s1345 = sand.u32 %s207, 1
          %s1346 = scalar_lea.sflag [#allocation5], %s1345
          %s1347 = sand.u32 %s207, 1
          %s1348 = smul.addr %s1347, 128
          %s1349 = scalar_lea.vmem [#allocation6], %s1348
          %1350 = dma.done %s1346, 2048
        $region68: #{tpu_custom_call.1} parent=63 // pred_fallthru
          _
      $region64: #{tpu_custom_call.1} parent=5 // pred_fallthru
        _
    $region6: #{tpu_custom_call.1} parent=1 // loop_footer
      %s24 = sadd.s32 1, %s20
    $region7: #{tpu_custom_call.1} parent=1 // loop_footer_branch
      %19 = sbr.rel target = $region3
    $region8: #{tpu_custom_call.1} parent=1 // loop_exit
      _
    %1351 = vsyncpa [#allocation4], 1
    %s1352 = scalar_lea.sflag [#allocation4], 1
    %1353 = vsyncpa %s1352, 1
    %1354 = vsyncpa [#allocation5], 1
    %s1355 = scalar_lea.sflag [#allocation5], 1
    %1356 = vsyncpa %s1355, 1

</llo_original>
